<compile_context>
chip_gen: v5e
topology: v5e:2x2
jax: 0.10.0
libtpu: 0.0.40
codegen_flags: <defaults>
</compile_context>

<pallas_src>
import jax
import jax.numpy as jnp
from jax.experimental import pallas as pl
from jax.experimental.pallas import tpu as pltpu

EPS = 1e-5            # nn.BatchNorm1d default eps
NEG_SLOPE = 0.2       # LeakyReLU negative_slope
MATMUL_IN_BF16 = True  # bf16 MXU operands / bf16 slab (f32 accumulation); False => exact f32


def _vmem_capacity_bytes():
    """Per-generation VMEM capacity; fall back to the smallest (v7x, 64 MiB)."""
    try:
        cap = int(pltpu.get_tpu_info().vmem_capacity_bytes)
        if cap > 0:
            return cap
    except Exception:
        pass
    return 64 * 1024 * 1024


def _make_fused_kernel(m_real, m_pad, c_in, growths, col_offsets):
    """Fused all-levels kernel; every size is baked in as a Python constant."""
    levels = len(growths)
    inv_m = 1.0 / float(m_real)
    needs_mask = (m_pad != m_real)

    def kernel(x_ref, *rest):
        h_ref = rest[-1]          # VMEM dense-concat slab (compute dtype)
        y_ref = rest[-2]          # lane-dense f32 output block
        wg = rest[:-2]            # (w_0, gb_0, w_1, gb_1, ...)

        # Seed the slab with x (pad rows already zeroed in the wrapper).  Every
        # later slab column is written before it is read, so no full zero-init.
        h_ref[:, :c_in] = x_ref[...]

        if needs_mask:
            rows = jax.lax.broadcasted_iota(jnp.int32, (m_pad, 1), 0)
            row_mask = (rows < m_real).astype(jnp.float32)

        for l in range(levels):
            col = col_offsets[l]                       # populated slab width (Python int)
            w_ref = wg[2 * l]
            gb_ref = wg[2 * l + 1]

            # Conv1d(kernel_size=1) == matmul; K trimmed to the populated columns.
            # Conv bias omitted: it cancels exactly under training-mode BatchNorm.
            z = jnp.dot(h_ref[:, :col], w_ref[...],
                        preferred_element_type=jnp.float32)        # (m_pad, g_eff) f32

            gamma = gb_ref[0:1, :]                                  # (1, g_eff)
            beta = gb_ref[1:2, :]

            # BatchNorm1d training-mode batch stats over the m_real rows, single pass.
            # Slab pad rows are zero => they contribute 0 to both sums.
            mean = jnp.sum(z, axis=0, keepdims=True) * inv_m
            ex2 = jnp.sum(z * z, axis=0, keepdims=True) * inv_m
            var = jnp.maximum(ex2 - mean * mean, 0.0)               # clamp: cancellation guard

            # Folded BN scale/shift + LeakyReLU(0.2)
            scale = gamma * jax.lax.rsqrt(var + EPS)
            shift = beta - mean * scale
            y = z * scale + shift
            y = jnp.maximum(y, NEG_SLOPE * y)                       # exact for slope < 1
            if needs_mask:
                y = y * row_mask                                    # keep pad rows zero

            if l == levels - 1:
                # Direct lane-dense store of the final level's y (128-wide padded cols
                # are exactly zero by construction of the padded weight/gamma/beta).
                y_ref[...] = y
            else:
                g = growths[l]
                h_ref[:, col:col + g] = y.astype(h_ref.dtype)       # dense concat append

    return kernel


def dense_module_1d(x, weights, gbs, in_dim, growths):
    """x: (N, C=in_dim, L) float32 (PyTorch NCL).  Returns the last level's y: (N, g_last, L)."""
    N, C, L = x.shape
    assert C == in_dim
    levels = len(growths)
    g_last = growths[-1]
    w_out = weights[-1].shape[-1]                    # g_last padded up to a multiple of 128
    M = N * L
    M_pad = max(((M + 7) // 8) * 8, 8)
    c_slab = in_dim + sum(growths[:-1])              # last level's y never enters the slab
    col_offsets = [in_dim + sum(growths[:l]) for l in range(levels)]
    slab_dtype = weights[0].dtype                    # bf16 (or f32 escape hatch)
    itemsize = jnp.dtype(slab_dtype).itemsize

    # channels-last 2-D view of x, already in the slab/matmul dtype, zero row padding
    h0 = jnp.transpose(x, (0, 2, 1)).reshape(M, C).astype(slab_dtype)
    if M_pad != M:
        h0 = jnp.pad(h0, ((0, M_pad - M), (0, 0)))

    kernel = _make_fused_kernel(M, M_pad, in_dim, growths, col_offsets)

    # VMEM budget: resident slab + (worst-case double-buffered) in/out blocks +
    # weights/gb blocks + f32 temporaries (z, z*z, y), with 2x headroom.
    est = (M_pad * c_slab * itemsize
           + 2 * M_pad * in_dim * itemsize
           + 2 * M_pad * w_out * 4
           + 2 * sum(int(w.size) * itemsize for w in weights)
           + 2 * sum(8 * int(gb.shape[-1]) * 4 for gb in gbs)
           + 8 * M_pad * w_out * 4)
    vmem_limit = int(min(max(2 * est, 16 * 1024 * 1024),
                         0.85 * _vmem_capacity_bytes()))

    flat_params = []
    for w, gb in zip(weights, gbs):
        flat_params += [w, gb]

    def build_and_call(single_buffer):
        def spec(shape):
            imap = lambda i: (0, 0)
            if single_buffer:
                # grid=(1,): nothing to pipeline, so don't pay for double-buffering
                return pl.BlockSpec(shape, imap, pipeline_mode=pl.Buffered(1))
            return pl.BlockSpec(shape, imap)

        in_specs = [spec((M_pad, in_dim))]
        for w, gb in zip(weights, gbs):
            in_specs.append(spec(w.shape))
            in_specs.append(spec(gb.shape))

        out = pl.pallas_call(
            kernel,
            out_shape=jax.ShapeDtypeStruct((M_pad, w_out), jnp.float32),
            grid=(1,),
            in_specs=in_specs,
            out_specs=spec((M_pad, w_out)),
            scratch_shapes=[pltpu.VMEM((M_pad, c_slab), slab_dtype)],  # resident dense slab
            compiler_params=pltpu.CompilerParams(
                dimension_semantics=("arbitrary",),
                vmem_limit_bytes=vmem_limit,
            ),
        )(h0, *flat_params)
        return jax.block_until_ready(out)

    try:
        out = build_and_call(single_buffer=True)
    except Exception:
        # Fallback for JAX builds where BlockSpec.pipeline_mode is not supported.
        out = build_and_call(single_buffer=False)

    y2d = out[:M, :g_last]                                   # (M, g_last) = last level's y
    return jnp.transpose(y2d.reshape(N, L, g_last), (0, 2, 1))


def init_params(key, in_dim=64, levels=3, growth_rate=64):
    """Parameters matching DenseModule1D.

    Conv weights are stored pre-transposed (Cin, Cout) in the matmul dtype; the last
    level's weight / gamma / beta are zero/one-padded to a multiple-of-128 output
    width so the kernel's final store is lane-dense.  The conv bias is intentionally
    not materialized: it cancels exactly under training-mode BatchNorm.
    """
    growths = [growth_rate] * (levels - 1) + [in_dim]        # last level grows by in_dim
    w_out = ((growths[-1] + 127) // 128) * 128
    cdt = jnp.bfloat16 if MATMUL_IN_BF16 else jnp.float32

    weights, gbs = [], []
    cin = in_dim
    for l, g in enumerate(growths):
        key, kw = jax.random.split(key)
        bound = 1.0 / (cin ** 0.5)                           # ~ PyTorch Conv1d default range
        w = jax.random.uniform(kw, (cin, g), jnp.float32, -bound, bound)
        g_eff = w_out if l == levels - 1 else g
        w_full = jnp.zeros((cin, g_eff), jnp.float32).at[:, :g].set(w)
        gb = jnp.zeros((2, g_eff), jnp.float32).at[0, :].set(1.0)    # gamma=1, beta=0
        weights.append(w_full.astype(cdt))
        gbs.append(gb)
        cin += g
    return weights, gbs, growths


def dense_module_1d_ref(x, weights, gbs, in_dim, growths):
    """Pure-JAX f32 reference mirroring DenseModule1D's forward (training-mode BN)."""
    N, C, L = x.shape
    h = jnp.transpose(x, (0, 2, 1)).reshape(N * L, C).astype(jnp.float32)
    y = None
    for l, g in enumerate(growths):
        w = weights[l].astype(jnp.float32)[:, :g]
        gamma = gbs[l][0, :g]
        beta = gbs[l][1, :g]
        z = h @ w
        mean = jnp.mean(z, axis=0, keepdims=True)
        var = jnp.mean((z - mean) ** 2, axis=0, keepdims=True)   # biased, like BN training
        yl = (z - mean) * jax.lax.rsqrt(var + EPS) * gamma + beta
        y = jnp.where(yl >= 0, yl, NEG_SLOPE * yl)
        h = jnp.concatenate([h, y], axis=1)
    g_last = growths[-1]
    return jnp.transpose(y.reshape(N, L, g_last), (0, 2, 1))


if __name__ == "__main__":
    key = jax.random.PRNGKey(0)
    k_x, k_p = jax.random.split(key)

    N, in_dim, L = 2, 64, 16
    x = jax.random.normal(k_x, (N, in_dim, L), dtype=jnp.float32)    # NCL, like PyTorch
    weights, gbs, growths = init_params(k_p, in_dim=in_dim, levels=3, growth_rate=64)

    y = dense_module_1d(x, weights, gbs, in_dim, growths)
    jax.block_until_ready(y)

    assert y.shape == (N, growths[-1], L), y.shape
    assert bool(jnp.isfinite(y).all())

    # tolerance check against the pure-JAX f32 reference (loose atol for the bf16 slab path)
    y_ref = dense_module_1d_ref(x, weights, gbs, in_dim, growths)
    tol = 1e-1 if MATMUL_IN_BF16 else 1e-4
    max_err = float(jnp.max(jnp.abs(y - y_ref)))
    assert max_err < tol, max_err

    print("KERNEL_OK")
</pallas_src>

<mosaic_0001>
module attributes {stable_mosaic.version = 11 : i64} {
  func.func @kernel(%arg0: i32, %arg1: memref<32x64xbf16, #tpu.memory_space<vmem>>, %arg2: memref<64x64xbf16, #tpu.memory_space<vmem>>, %arg3: memref<2x64xf32, #tpu.memory_space<vmem>>, %arg4: memref<128x64xbf16, #tpu.memory_space<vmem>>, %arg5: memref<2x64xf32, #tpu.memory_space<vmem>>, %arg6: memref<192x128xbf16, #tpu.memory_space<vmem>>, %arg7: memref<2x128xf32, #tpu.memory_space<vmem>>, %arg8: memref<32x128xf32, #tpu.memory_space<vmem>>, %arg9: memref<32x192xbf16, #tpu.memory_space<vmem>>) attributes {dimension_semantics = [#tpu.dimension_semantics<arbitrary>], iteration_bounds = array<i64: 1>, scalar_prefetch = 0 : i64, scratch_operands = 1 : i64, tpu.core_type = #tpu.core_type<tc>, window_params = [{pipeline_mode = #tpu.pipeline_mode<synchronous>, transform_indices = @transform_0, window_bounds = array<i64: 32, 64>}, {pipeline_mode = #tpu.pipeline_mode<synchronous>, transform_indices = @transform_1, window_bounds = array<i64: 64, 64>}, {pipeline_mode = #tpu.pipeline_mode<synchronous>, transform_indices = @transform_2, window_bounds = array<i64: 2, 64>}, {pipeline_mode = #tpu.pipeline_mode<synchronous>, transform_indices = @transform_3, window_bounds = array<i64: 128, 64>}, {pipeline_mode = #tpu.pipeline_mode<synchronous>, transform_indices = @transform_4, window_bounds = array<i64: 2, 64>}, {pipeline_mode = #tpu.pipeline_mode<synchronous>, transform_indices = @transform_5, window_bounds = array<i64: 192, 128>}, {pipeline_mode = #tpu.pipeline_mode<synchronous>, transform_indices = @transform_6, window_bounds = array<i64: 2, 128>}, {pipeline_mode = #tpu.pipeline_mode<synchronous>, transform_indices = @transform_7, window_bounds = array<i64: 32, 128>}]} {
    %c0 = arith.constant 0 : index
    %c0_0 = arith.constant 0 : index
    %0 = vector.load %arg1[%c0, %c0_0] : memref<32x64xbf16, #tpu.memory_space<vmem>>, vector<32x64xbf16>
    %c0_1 = arith.constant 0 : index
    %c0_2 = arith.constant 0 : index
    %1 = vector.load %arg9[%c0_1, %c0_2] : memref<32x192xbf16, #tpu.memory_space<vmem>>, vector<32x64xbf16>
    tpu.vector_store %arg9[%c0_1, %c0_2], %0 {strides = array<i32>} : memref<32x192xbf16, #tpu.memory_space<vmem>>, vector<32x64xbf16>,
    %c0_3 = arith.constant 0 : index
    %c0_4 = arith.constant 0 : index
    %2 = vector.load %arg9[%c0_3, %c0_4] : memref<32x192xbf16, #tpu.memory_space<vmem>>, vector<32x64xbf16>
    %c0_5 = arith.constant 0 : index
    %c0_6 = arith.constant 0 : index
    %3 = vector.load %arg2[%c0_5, %c0_6] : memref<64x64xbf16, #tpu.memory_space<vmem>>, vector<64x64xbf16>
    %cst = arith.constant dense<0.000000e+00> : vector<32x64xf32>
    %4 = tpu.matmul %2, %3, %cst {dimension_numbers = #tpu.dot_dimension_numbers<[1], [0], [0], [1], [0, 0, 1, 1], [], []>} : vector<32x64xbf16>, vector<64x64xbf16>, vector<32x64xf32> -> vector<32x64xf32>
    %c0_7 = arith.constant 0 : index
    %c0_8 = arith.constant 0 : index
    %5 = vector.load %arg3[%c0_7, %c0_8] : memref<2x64xf32, #tpu.memory_space<vmem>>, vector<1x64xf32>
    %c1 = arith.constant 1 : index
    %c0_9 = arith.constant 0 : index
    %6 = vector.load %arg3[%c1, %c0_9] : memref<2x64xf32, #tpu.memory_space<vmem>>, vector<1x64xf32>
    %cst_10 = arith.constant dense<0.000000e+00> : vector<64xf32>
    %7 = vector.multi_reduction <add>, %4, %cst_10 [0] : vector<32x64xf32> to vector<64xf32>
    %8 = vector.shape_cast %7 : vector<64xf32> to vector<1x64xf32>
    %cst_11 = arith.constant 3.125000e-02 : f32
    %9 = vector.broadcast %cst_11 : f32 to vector<1x64xf32>
    %10 = arith.mulf %8, %9 : vector<1x64xf32>
    %11 = arith.mulf %4, %4 : vector<32x64xf32>
    %cst_12 = arith.constant dense<0.000000e+00> : vector<64xf32>
    %12 = vector.multi_reduction <add>, %11, %cst_12 [0] : vector<32x64xf32> to vector<64xf32>
    %13 = vector.shape_cast %12 : vector<64xf32> to vector<1x64xf32>
    %cst_13 = arith.constant 3.125000e-02 : f32
    %14 = vector.broadcast %cst_13 : f32 to vector<1x64xf32>
    %15 = arith.mulf %13, %14 : vector<1x64xf32>
    %16 = arith.mulf %10, %10 : vector<1x64xf32>
    %17 = arith.subf %15, %16 : vector<1x64xf32>
    %cst_14 = arith.constant 0.000000e+00 : f32
    %18 = vector.broadcast %cst_14 : f32 to vector<1x64xf32>
    %19 = arith.maximumf %17, %18 : vector<1x64xf32>
    %cst_15 = arith.constant 9.99999974E-6 : f32
    %20 = vector.broadcast %cst_15 : f32 to vector<1x64xf32>
    %21 = arith.addf %19, %20 : vector<1x64xf32>
    %22 = math.rsqrt %21 : vector<1x64xf32>
    %23 = arith.mulf %5, %22 : vector<1x64xf32>
    %24 = arith.mulf %10, %23 : vector<1x64xf32>
    %25 = arith.subf %6, %24 : vector<1x64xf32>
    %26 = vector.broadcast %23 : vector<1x64xf32> to vector<32x64xf32>
    %27 = arith.mulf %4, %26 : vector<32x64xf32>
    %28 = vector.broadcast %25 : vector<1x64xf32> to vector<32x64xf32>
    %29 = arith.addf %27, %28 : vector<32x64xf32>
    %cst_16 = arith.constant 2.000000e-01 : f32
    %30 = vector.broadcast %cst_16 : f32 to vector<32x64xf32>
    %31 = arith.mulf %30, %29 : vector<32x64xf32>
    %32 = arith.maximumf %29, %31 : vector<32x64xf32>
    %33 = arith.truncf %32 : vector<32x64xf32> to vector<32x64xbf16>
    %c0_17 = arith.constant 0 : index
    %c64 = arith.constant 64 : index
    %34 = vector.load %arg9[%c0_17, %c64] : memref<32x192xbf16, #tpu.memory_space<vmem>>, vector<32x64xbf16>
    tpu.vector_store %arg9[%c0_17, %c64], %33 {strides = array<i32>} : memref<32x192xbf16, #tpu.memory_space<vmem>>, vector<32x64xbf16>,
    %c0_18 = arith.constant 0 : index
    %c0_19 = arith.constant 0 : index
    %35 = vector.load %arg9[%c0_18, %c0_19] : memref<32x192xbf16, #tpu.memory_space<vmem>>, vector<32x128xbf16>
    %c0_20 = arith.constant 0 : index
    %c0_21 = arith.constant 0 : index
    %36 = vector.load %arg4[%c0_20, %c0_21] : memref<128x64xbf16, #tpu.memory_space<vmem>>, vector<128x64xbf16>
    %cst_22 = arith.constant dense<0.000000e+00> : vector<32x64xf32>
    %37 = tpu.matmul %35, %36, %cst_22 {dimension_numbers = #tpu.dot_dimension_numbers<[1], [0], [0], [1], [0, 0, 1, 1], [], []>} : vector<32x128xbf16>, vector<128x64xbf16>, vector<32x64xf32> -> vector<32x64xf32>
    %c0_23 = arith.constant 0 : index
    %c0_24 = arith.constant 0 : index
    %38 = vector.load %arg5[%c0_23, %c0_24] : memref<2x64xf32, #tpu.memory_space<vmem>>, vector<1x64xf32>
    %c1_25 = arith.constant 1 : index
    %c0_26 = arith.constant 0 : index
    %39 = vector.load %arg5[%c1_25, %c0_26] : memref<2x64xf32, #tpu.memory_space<vmem>>, vector<1x64xf32>
    %cst_27 = arith.constant dense<0.000000e+00> : vector<64xf32>
    %40 = vector.multi_reduction <add>, %37, %cst_27 [0] : vector<32x64xf32> to vector<64xf32>
    %41 = vector.shape_cast %40 : vector<64xf32> to vector<1x64xf32>
    %cst_28 = arith.constant 3.125000e-02 : f32
    %42 = vector.broadcast %cst_28 : f32 to vector<1x64xf32>
    %43 = arith.mulf %41, %42 : vector<1x64xf32>
    %44 = arith.mulf %37, %37 : vector<32x64xf32>
    %cst_29 = arith.constant dense<0.000000e+00> : vector<64xf32>
    %45 = vector.multi_reduction <add>, %44, %cst_29 [0] : vector<32x64xf32> to vector<64xf32>
    %46 = vector.shape_cast %45 : vector<64xf32> to vector<1x64xf32>
    %cst_30 = arith.constant 3.125000e-02 : f32
    %47 = vector.broadcast %cst_30 : f32 to vector<1x64xf32>
    %48 = arith.mulf %46, %47 : vector<1x64xf32>
    %49 = arith.mulf %43, %43 : vector<1x64xf32>
    %50 = arith.subf %48, %49 : vector<1x64xf32>
    %cst_31 = arith.constant 0.000000e+00 : f32
    %51 = vector.broadcast %cst_31 : f32 to vector<1x64xf32>
    %52 = arith.maximumf %50, %51 : vector<1x64xf32>
    %cst_32 = arith.constant 9.99999974E-6 : f32
    %53 = vector.broadcast %cst_32 : f32 to vector<1x64xf32>
    %54 = arith.addf %52, %53 : vector<1x64xf32>
    %55 = math.rsqrt %54 : vector<1x64xf32>
    %56 = arith.mulf %38, %55 : vector<1x64xf32>
    %57 = arith.mulf %43, %56 : vector<1x64xf32>
    %58 = arith.subf %39, %57 : vector<1x64xf32>
    %59 = vector.broadcast %56 : vector<1x64xf32> to vector<32x64xf32>
    %60 = arith.mulf %37, %59 : vector<32x64xf32>
    %61 = vector.broadcast %58 : vector<1x64xf32> to vector<32x64xf32>
    %62 = arith.addf %60, %61 : vector<32x64xf32>
    %cst_33 = arith.constant 2.000000e-01 : f32
    %63 = vector.broadcast %cst_33 : f32 to vector<32x64xf32>
    %64 = arith.mulf %63, %62 : vector<32x64xf32>
    %65 = arith.maximumf %62, %64 : vector<32x64xf32>
    %66 = arith.truncf %65 : vector<32x64xf32> to vector<32x64xbf16>
    %c0_34 = arith.constant 0 : index
    %c128 = arith.constant 128 : index
    %67 = vector.load %arg9[%c0_34, %c128] : memref<32x192xbf16, #tpu.memory_space<vmem>>, vector<32x64xbf16>
    tpu.vector_store %arg9[%c0_34, %c128], %66 {strides = array<i32>} : memref<32x192xbf16, #tpu.memory_space<vmem>>, vector<32x64xbf16>,
    %c0_35 = arith.constant 0 : index
    %c0_36 = arith.constant 0 : index
    %68 = vector.load %arg9[%c0_35, %c0_36] : memref<32x192xbf16, #tpu.memory_space<vmem>>, vector<32x192xbf16>
    %c0_37 = arith.constant 0 : index
    %c0_38 = arith.constant 0 : index
    %69 = vector.load %arg6[%c0_37, %c0_38] : memref<192x128xbf16, #tpu.memory_space<vmem>>, vector<192x128xbf16>
    %cst_39 = arith.constant dense<0.000000e+00> : vector<32x128xf32>
    %70 = tpu.matmul %68, %69, %cst_39 {dimension_numbers = #tpu.dot_dimension_numbers<[1], [0], [0], [1], [0, 0, 1, 1], [], []>} : vector<32x192xbf16>, vector<192x128xbf16>, vector<32x128xf32> -> vector<32x128xf32>
    %c0_40 = arith.constant 0 : index
    %c0_41 = arith.constant 0 : index
    %71 = vector.load %arg7[%c0_40, %c0_41] : memref<2x128xf32, #tpu.memory_space<vmem>>, vector<1x128xf32>
    %c1_42 = arith.constant 1 : index
    %c0_43 = arith.constant 0 : index
    %72 = vector.load %arg7[%c1_42, %c0_43] : memref<2x128xf32, #tpu.memory_space<vmem>>, vector<1x128xf32>
    %cst_44 = arith.constant dense<0.000000e+00> : vector<128xf32>
    %73 = vector.multi_reduction <add>, %70, %cst_44 [0] : vector<32x128xf32> to vector<128xf32>
    %74 = vector.shape_cast %73 : vector<128xf32> to vector<1x128xf32>
    %cst_45 = arith.constant 3.125000e-02 : f32
    %75 = vector.broadcast %cst_45 : f32 to vector<1x128xf32>
    %76 = arith.mulf %74, %75 : vector<1x128xf32>
    %77 = arith.mulf %70, %70 : vector<32x128xf32>
    %cst_46 = arith.constant dense<0.000000e+00> : vector<128xf32>
    %78 = vector.multi_reduction <add>, %77, %cst_46 [0] : vector<32x128xf32> to vector<128xf32>
    %79 = vector.shape_cast %78 : vector<128xf32> to vector<1x128xf32>
    %cst_47 = arith.constant 3.125000e-02 : f32
    %80 = vector.broadcast %cst_47 : f32 to vector<1x128xf32>
    %81 = arith.mulf %79, %80 : vector<1x128xf32>
    %82 = arith.mulf %76, %76 : vector<1x128xf32>
    %83 = arith.subf %81, %82 : vector<1x128xf32>
    %cst_48 = arith.constant 0.000000e+00 : f32
    %84 = vector.broadcast %cst_48 : f32 to vector<1x128xf32>
    %85 = arith.maximumf %83, %84 : vector<1x128xf32>
    %cst_49 = arith.constant 9.99999974E-6 : f32
    %86 = vector.broadcast %cst_49 : f32 to vector<1x128xf32>
    %87 = arith.addf %85, %86 : vector<1x128xf32>
    %88 = math.rsqrt %87 : vector<1x128xf32>
    %89 = arith.mulf %71, %88 : vector<1x128xf32>
    %90 = arith.mulf %76, %89 : vector<1x128xf32>
    %91 = arith.subf %72, %90 : vector<1x128xf32>
    %92 = vector.broadcast %89 : vector<1x128xf32> to vector<32x128xf32>
    %93 = arith.mulf %70, %92 : vector<32x128xf32>
    %94 = vector.broadcast %91 : vector<1x128xf32> to vector<32x128xf32>
    %95 = arith.addf %93, %94 : vector<32x128xf32>
    %cst_50 = arith.constant 2.000000e-01 : f32
    %96 = vector.broadcast %cst_50 : f32 to vector<32x128xf32>
    %97 = arith.mulf %96, %95 : vector<32x128xf32>
    %98 = arith.maximumf %95, %97 : vector<32x128xf32>
    %c0_51 = arith.constant 0 : index
    %c0_52 = arith.constant 0 : index
    %99 = vector.load %arg8[%c0_51, %c0_52] : memref<32x128xf32, #tpu.memory_space<vmem>>, vector<32x128xf32>
    tpu.vector_store %arg8[%c0_51, %c0_52], %98 {strides = array<i32>} : memref<32x128xf32, #tpu.memory_space<vmem>>, vector<32x128xf32>,
    return
  }
  func.func @transform_0(%arg0: i32) -> (i32, i32) {
    %c0_i32 = arith.constant 0 : i32
    %c0_i32_0 = arith.constant 0 : i32
    %c0_i32_1 = arith.constant 0 : i32
    return %c0_i32, %c0_i32_0 : i32, i32
  }
  func.func @transform_1(%arg0: i32) -> (i32, i32) {
    %c0_i32 = arith.constant 0 : i32
    %c0_i32_0 = arith.constant 0 : i32
    %c0_i32_1 = arith.constant 0 : i32
    return %c0_i32, %c0_i32_0 : i32, i32
  }
  func.func @transform_2(%arg0: i32) -> (i32, i32) {
    %c0_i32 = arith.constant 0 : i32
    %c0_i32_0 = arith.constant 0 : i32
    %c0_i32_1 = arith.constant 0 : i32
    return %c0_i32, %c0_i32_0 : i32, i32
  }
  func.func @transform_3(%arg0: i32) -> (i32, i32) {
    %c0_i32 = arith.constant 0 : i32
    %c0_i32_0 = arith.constant 0 : i32
    %c0_i32_1 = arith.constant 0 : i32
    return %c0_i32, %c0_i32_0 : i32, i32
  }
  func.func @transform_4(%arg0: i32) -> (i32, i32) {
    %c0_i32 = arith.constant 0 : i32
    %c0_i32_0 = arith.constant 0 : i32
    %c0_i32_1 = arith.constant 0 : i32
    return %c0_i32, %c0_i32_0 : i32, i32
  }
  func.func @transform_5(%arg0: i32) -> (i32, i32) {
    %c0_i32 = arith.constant 0 : i32
    %c0_i32_0 = arith.constant 0 : i32
    %c0_i32_1 = arith.constant 0 : i32
    return %c0_i32, %c0_i32_0 : i32, i32
  }
  func.func @transform_6(%arg0: i32) -> (i32, i32) {
    %c0_i32 = arith.constant 0 : i32
    %c0_i32_0 = arith.constant 0 : i32
    %c0_i32_1 = arith.constant 0 : i32
    return %c0_i32, %c0_i32_0 : i32, i32
  }
  func.func @transform_7(%arg0: i32) -> (i32, i32) {
    %c0_i32 = arith.constant 0 : i32
    %c0_i32_0 = arith.constant 0 : i32
    %c0_i32_1 = arith.constant 0 : i32
    return %c0_i32, %c0_i32_0 : i32, i32
  }
}

module attributes {stable_mosaic.version = 11 : i64} {
  func.func @kernel(%arg0: i32, %arg1: memref<32x64xbf16, #tpu.memory_space<vmem>>, %arg2: memref<64x64xbf16, #tpu.memory_space<vmem>>, %arg3: memref<2x64xf32, #tpu.memory_space<vmem>>, %arg4: memref<128x64xbf16, #tpu.memory_space<vmem>>, %arg5: memref<2x64xf32, #tpu.memory_space<vmem>>, %arg6: memref<192x128xbf16, #tpu.memory_space<vmem>>, %arg7: memref<2x128xf32, #tpu.memory_space<vmem>>, %arg8: memref<32x128xf32, #tpu.memory_space<vmem>>, %arg9: memref<32x192xbf16, #tpu.memory_space<vmem>>) attributes {dimension_semantics = [#tpu.dimension_semantics<arbitrary>], iteration_bounds = array<i64: 1>, scalar_prefetch = 0 : i64, scratch_operands = 1 : i64, tpu.core_type = #tpu.core_type<tc>, window_params = [{pipeline_mode = #tpu.pipeline_mode<synchronous>, transform_indices = @transform_0, window_bounds = array<i64: 32, 64>}, {pipeline_mode = #tpu.pipeline_mode<synchronous>, transform_indices = @transform_1, window_bounds = array<i64: 64, 64>}, {pipeline_mode = #tpu.pipeline_mode<synchronous>, transform_indices = @transform_2, window_bounds = array<i64: 2, 64>}, {pipeline_mode = #tpu.pipeline_mode<synchronous>, transform_indices = @transform_3, window_bounds = array<i64: 128, 64>}, {pipeline_mode = #tpu.pipeline_mode<synchronous>, transform_indices = @transform_4, window_bounds = array<i64: 2, 64>}, {pipeline_mode = #tpu.pipeline_mode<synchronous>, transform_indices = @transform_5, window_bounds = array<i64: 192, 128>}, {pipeline_mode = #tpu.pipeline_mode<synchronous>, transform_indices = @transform_6, window_bounds = array<i64: 2, 128>}, {pipeline_mode = #tpu.pipeline_mode<synchronous>, transform_indices = @transform_7, window_bounds = array<i64: 32, 128>}]} {
    %c0 = arith.constant 0 : index
    %c0_0 = arith.constant 0 : index
    %0 = vector.load %arg1[%c0, %c0_0] : memref<32x64xbf16, #tpu.memory_space<vmem>>, vector<32x64xbf16>
    %c0_1 = arith.constant 0 : index
    %c0_2 = arith.constant 0 : index
    %1 = vector.load %arg9[%c0_1, %c0_2] : memref<32x192xbf16, #tpu.memory_space<vmem>>, vector<32x64xbf16>
    tpu.vector_store %arg9[%c0_1, %c0_2], %0 {strides = array<i32>} : memref<32x192xbf16, #tpu.memory_space<vmem>>, vector<32x64xbf16>,
    %c0_3 = arith.constant 0 : index
    %c0_4 = arith.constant 0 : index
    %2 = vector.load %arg9[%c0_3, %c0_4] : memref<32x192xbf16, #tpu.memory_space<vmem>>, vector<32x64xbf16>
    %c0_5 = arith.constant 0 : index
    %c0_6 = arith.constant 0 : index
    %3 = vector.load %arg2[%c0_5, %c0_6] : memref<64x64xbf16, #tpu.memory_space<vmem>>, vector<64x64xbf16>
    %cst = arith.constant dense<0.000000e+00> : vector<32x64xf32>
    %4 = tpu.matmul %2, %3, %cst {dimension_numbers = #tpu.dot_dimension_numbers<[1], [0], [0], [1], [0, 0, 1, 1], [], []>} : vector<32x64xbf16>, vector<64x64xbf16>, vector<32x64xf32> -> vector<32x64xf32>
    %c0_7 = arith.constant 0 : index
    %c0_8 = arith.constant 0 : index
    %5 = vector.load %arg3[%c0_7, %c0_8] : memref<2x64xf32, #tpu.memory_space<vmem>>, vector<1x64xf32>
    %c1 = arith.constant 1 : index
    %c0_9 = arith.constant 0 : index
    %6 = vector.load %arg3[%c1, %c0_9] : memref<2x64xf32, #tpu.memory_space<vmem>>, vector<1x64xf32>
    %cst_10 = arith.constant dense<0.000000e+00> : vector<64xf32>
    %7 = vector.multi_reduction <add>, %4, %cst_10 [0] : vector<32x64xf32> to vector<64xf32>
    %8 = vector.shape_cast %7 : vector<64xf32> to vector<1x64xf32>
    %cst_11 = arith.constant 3.125000e-02 : f32
    %9 = vector.broadcast %cst_11 : f32 to vector<1x64xf32>
    %10 = arith.mulf %8, %9 : vector<1x64xf32>
    %11 = arith.mulf %4, %4 : vector<32x64xf32>
    %cst_12 = arith.constant dense<0.000000e+00> : vector<64xf32>
    %12 = vector.multi_reduction <add>, %11, %cst_12 [0] : vector<32x64xf32> to vector<64xf32>
    %13 = vector.shape_cast %12 : vector<64xf32> to vector<1x64xf32>
    %cst_13 = arith.constant 3.125000e-02 : f32
    %14 = vector.broadcast %cst_13 : f32 to vector<1x64xf32>
    %15 = arith.mulf %13, %14 : vector<1x64xf32>
    %16 = arith.mulf %10, %10 : vector<1x64xf32>
    %17 = arith.subf %15, %16 : vector<1x64xf32>
    %cst_14 = arith.constant 0.000000e+00 : f32
    %18 = vector.broadcast %cst_14 : f32 to vector<1x64xf32>
    %19 = arith.maximumf %17, %18 : vector<1x64xf32>
    %cst_15 = arith.constant 9.99999974E-6 : f32
    %20 = vector.broadcast %cst_15 : f32 to vector<1x64xf32>
    %21 = arith.addf %19, %20 : vector<1x64xf32>
    %22 = math.rsqrt %21 : vector<1x64xf32>
    %23 = arith.mulf %5, %22 : vector<1x64xf32>
    %24 = arith.mulf %10, %23 : vector<1x64xf32>
    %25 = arith.subf %6, %24 : vector<1x64xf32>
    %26 = vector.broadcast %23 : vector<1x64xf32> to vector<32x64xf32>
    %27 = arith.mulf %4, %26 : vector<32x64xf32>
    %28 = vector.broadcast %25 : vector<1x64xf32> to vector<32x64xf32>
    %29 = arith.addf %27, %28 : vector<32x64xf32>
    %cst_16 = arith.constant 2.000000e-01 : f32
    %30 = vector.broadcast %cst_16 : f32 to vector<32x64xf32>
    %31 = arith.mulf %30, %29 : vector<32x64xf32>
    %32 = arith.maximumf %29, %31 : vector<32x64xf32>
    %33 = arith.truncf %32 : vector<32x64xf32> to vector<32x64xbf16>
    %c0_17 = arith.constant 0 : index
    %c64 = arith.constant 64 : index
    %34 = vector.load %arg9[%c0_17, %c64] : memref<32x192xbf16, #tpu.memory_space<vmem>>, vector<32x64xbf16>
    tpu.vector_store %arg9[%c0_17, %c64], %33 {strides = array<i32>} : memref<32x192xbf16, #tpu.memory_space<vmem>>, vector<32x64xbf16>,
    %c0_18 = arith.constant 0 : index
    %c0_19 = arith.constant 0 : index
    %35 = vector.load %arg9[%c0_18, %c0_19] : memref<32x192xbf16, #tpu.memory_space<vmem>>, vector<32x128xbf16>
    %c0_20 = arith.constant 0 : index
    %c0_21 = arith.constant 0 : index
    %36 = vector.load %arg4[%c0_20, %c0_21] : memref<128x64xbf16, #tpu.memory_space<vmem>>, vector<128x64xbf16>
    %cst_22 = arith.constant dense<0.000000e+00> : vector<32x64xf32>
    %37 = tpu.matmul %35, %36, %cst_22 {dimension_numbers = #tpu.dot_dimension_numbers<[1], [0], [0], [1], [0, 0, 1, 1], [], []>} : vector<32x128xbf16>, vector<128x64xbf16>, vector<32x64xf32> -> vector<32x64xf32>
    %c0_23 = arith.constant 0 : index
    %c0_24 = arith.constant 0 : index
    %38 = vector.load %arg5[%c0_23, %c0_24] : memref<2x64xf32, #tpu.memory_space<vmem>>, vector<1x64xf32>
    %c1_25 = arith.constant 1 : index
    %c0_26 = arith.constant 0 : index
    %39 = vector.load %arg5[%c1_25, %c0_26] : memref<2x64xf32, #tpu.memory_space<vmem>>, vector<1x64xf32>
    %cst_27 = arith.constant dense<0.000000e+00> : vector<64xf32>
    %40 = vector.multi_reduction <add>, %37, %cst_27 [0] : vector<32x64xf32> to vector<64xf32>
    %41 = vector.shape_cast %40 : vector<64xf32> to vector<1x64xf32>
    %cst_28 = arith.constant 3.125000e-02 : f32
    %42 = vector.broadcast %cst_28 : f32 to vector<1x64xf32>
    %43 = arith.mulf %41, %42 : vector<1x64xf32>
    %44 = arith.mulf %37, %37 : vector<32x64xf32>
    %cst_29 = arith.constant dense<0.000000e+00> : vector<64xf32>
    %45 = vector.multi_reduction <add>, %44, %cst_29 [0] : vector<32x64xf32> to vector<64xf32>
    %46 = vector.shape_cast %45 : vector<64xf32> to vector<1x64xf32>
    %cst_30 = arith.constant 3.125000e-02 : f32
    %47 = vector.broadcast %cst_30 : f32 to vector<1x64xf32>
    %48 = arith.mulf %46, %47 : vector<1x64xf32>
    %49 = arith.mulf %43, %43 : vector<1x64xf32>
    %50 = arith.subf %48, %49 : vector<1x64xf32>
    %cst_31 = arith.constant 0.000000e+00 : f32
    %51 = vector.broadcast %cst_31 : f32 to vector<1x64xf32>
    %52 = arith.maximumf %50, %51 : vector<1x64xf32>
    %cst_32 = arith.constant 9.99999974E-6 : f32
    %53 = vector.broadcast %cst_32 : f32 to vector<1x64xf32>
    %54 = arith.addf %52, %53 : vector<1x64xf32>
    %55 = math.rsqrt %54 : vector<1x64xf32>
    %56 = arith.mulf %38, %55 : vector<1x64xf32>
    %57 = arith.mulf %43, %56 : vector<1x64xf32>
    %58 = arith.subf %39, %57 : vector<1x64xf32>
    %59 = vector.broadcast %56 : vector<1x64xf32> to vector<32x64xf32>
    %60 = arith.mulf %37, %59 : vector<32x64xf32>
    %61 = vector.broadcast %58 : vector<1x64xf32> to vector<32x64xf32>
    %62 = arith.addf %60, %61 : vector<32x64xf32>
    %cst_33 = arith.constant 2.000000e-01 : f32
    %63 = vector.broadcast %cst_33 : f32 to vector<32x64xf32>
    %64 = arith.mulf %63, %62 : vector<32x64xf32>
    %65 = arith.maximumf %62, %64 : vector<32x64xf32>
    %66 = arith.truncf %65 : vector<32x64xf32> to vector<32x64xbf16>
    %c0_34 = arith.constant 0 : index
    %c128 = arith.constant 128 : index
    %67 = vector.load %arg9[%c0_34, %c128] : memref<32x192xbf16, #tpu.memory_space<vmem>>, vector<32x64xbf16>
    tpu.vector_store %arg9[%c0_34, %c128], %66 {strides = array<i32>} : memref<32x192xbf16, #tpu.memory_space<vmem>>, vector<32x64xbf16>,
    %c0_35 = arith.constant 0 : index
    %c0_36 = arith.constant 0 : index
    %68 = vector.load %arg9[%c0_35, %c0_36] : memref<32x192xbf16, #tpu.memory_space<vmem>>, vector<32x192xbf16>
    %c0_37 = arith.constant 0 : index
    %c0_38 = arith.constant 0 : index
    %69 = vector.load %arg6[%c0_37, %c0_38] : memref<192x128xbf16, #tpu.memory_space<vmem>>, vector<192x128xbf16>
    %cst_39 = arith.constant dense<0.000000e+00> : vector<32x128xf32>
    %70 = tpu.matmul %68, %69, %cst_39 {dimension_numbers = #tpu.dot_dimension_numbers<[1], [0], [0], [1], [0, 0, 1, 1], [], []>} : vector<32x192xbf16>, vector<192x128xbf16>, vector<32x128xf32> -> vector<32x128xf32>
    %c0_40 = arith.constant 0 : index
    %c0_41 = arith.constant 0 : index
    %71 = vector.load %arg7[%c0_40, %c0_41] : memref<2x128xf32, #tpu.memory_space<vmem>>, vector<1x128xf32>
    %c1_42 = arith.constant 1 : index
    %c0_43 = arith.constant 0 : index
    %72 = vector.load %arg7[%c1_42, %c0_43] : memref<2x128xf32, #tpu.memory_space<vmem>>, vector<1x128xf32>
    %cst_44 = arith.constant dense<0.000000e+00> : vector<128xf32>
    %73 = vector.multi_reduction <add>, %70, %cst_44 [0] : vector<32x128xf32> to vector<128xf32>
    %74 = vector.shape_cast %73 : vector<128xf32> to vector<1x128xf32>
    %cst_45 = arith.constant 3.125000e-02 : f32
    %75 = vector.broadcast %cst_45 : f32 to vector<1x128xf32>
    %76 = arith.mulf %74, %75 : vector<1x128xf32>
    %77 = arith.mulf %70, %70 : vector<32x128xf32>
    %cst_46 = arith.constant dense<0.000000e+00> : vector<128xf32>
    %78 = vector.multi_reduction <add>, %77, %cst_46 [0] : vector<32x128xf32> to vector<128xf32>
    %79 = vector.shape_cast %78 : vector<128xf32> to vector<1x128xf32>
    %cst_47 = arith.constant 3.125000e-02 : f32
    %80 = vector.broadcast %cst_47 : f32 to vector<1x128xf32>
    %81 = arith.mulf %79, %80 : vector<1x128xf32>
    %82 = arith.mulf %76, %76 : vector<1x128xf32>
    %83 = arith.subf %81, %82 : vector<1x128xf32>
    %cst_48 = arith.constant 0.000000e+00 : f32
    %84 = vector.broadcast %cst_48 : f32 to vector<1x128xf32>
    %85 = arith.maximumf %83, %84 : vector<1x128xf32>
    %cst_49 = arith.constant 9.99999974E-6 : f32
    %86 = vector.broadcast %cst_49 : f32 to vector<1x128xf32>
    %87 = arith.addf %85, %86 : vector<1x128xf32>
    %88 = math.rsqrt %87 : vector<1x128xf32>
    %89 = arith.mulf %71, %88 : vector<1x128xf32>
    %90 = arith.mulf %76, %89 : vector<1x128xf32>
    %91 = arith.subf %72, %90 : vector<1x128xf32>
    %92 = vector.broadcast %89 : vector<1x128xf32> to vector<32x128xf32>
    %93 = arith.mulf %70, %92 : vector<32x128xf32>
    %94 = vector.broadcast %91 : vector<1x128xf32> to vector<32x128xf32>
    %95 = arith.addf %93, %94 : vector<32x128xf32>
    %cst_50 = arith.constant 2.000000e-01 : f32
    %96 = vector.broadcast %cst_50 : f32 to vector<32x128xf32>
    %97 = arith.mulf %96, %95 : vector<32x128xf32>
    %98 = arith.maximumf %95, %97 : vector<32x128xf32>
    %c0_51 = arith.constant 0 : index
    %c0_52 = arith.constant 0 : index
    %99 = vector.load %arg8[%c0_51, %c0_52] : memref<32x128xf32, #tpu.memory_space<vmem>>, vector<32x128xf32>
    tpu.vector_store %arg8[%c0_51, %c0_52], %98 {strides = array<i32>} : memref<32x128xf32, #tpu.memory_space<vmem>>, vector<32x128xf32>,
    return
  }
  func.func @transform_0(%arg0: i32) -> (i32, i32) {
    %c0_i32 = arith.constant 0 : i32
    %c0_i32_0 = arith.constant 0 : i32
    %c0_i32_1 = arith.constant 0 : i32
    return %c0_i32, %c0_i32_0 : i32, i32
  }
  func.func @transform_1(%arg0: i32) -> (i32, i32) {
    %c0_i32 = arith.constant 0 : i32
    %c0_i32_0 = arith.constant 0 : i32
    %c0_i32_1 = arith.constant 0 : i32
    return %c0_i32, %c0_i32_0 : i32, i32
  }
  func.func @transform_2(%arg0: i32) -> (i32, i32) {
    %c0_i32 = arith.constant 0 : i32
    %c0_i32_0 = arith.constant 0 : i32
    %c0_i32_1 = arith.constant 0 : i32
    return %c0_i32, %c0_i32_0 : i32, i32
  }
  func.func @transform_3(%arg0: i32) -> (i32, i32) {
    %c0_i32 = arith.constant 0 : i32
    %c0_i32_0 = arith.constant 0 : i32
    %c0_i32_1 = arith.constant 0 : i32
    return %c0_i32, %c0_i32_0 : i32, i32
  }
  func.func @transform_4(%arg0: i32) -> (i32, i32) {
    %c0_i32 = arith.constant 0 : i32
    %c0_i32_0 = arith.constant 0 : i32
    %c0_i32_1 = arith.constant 0 : i32
    return %c0_i32, %c0_i32_0 : i32, i32
  }
  func.func @transform_5(%arg0: i32) -> (i32, i32) {
    %c0_i32 = arith.constant 0 : i32
    %c0_i32_0 = arith.constant 0 : i32
    %c0_i32_1 = arith.constant 0 : i32
    return %c0_i32, %c0_i32_0 : i32, i32
  }
  func.func @transform_6(%arg0: i32) -> (i32, i32) {
    %c0_i32 = arith.constant 0 : i32
    %c0_i32_0 = arith.constant 0 : i32
    %c0_i32_1 = arith.constant 0 : i32
    return %c0_i32, %c0_i32_0 : i32, i32
  }
  func.func @transform_7(%arg0: i32) -> (i32, i32) {
    %c0_i32 = arith.constant 0 : i32
    %c0_i32_0 = arith.constant 0 : i32
    %c0_i32_1 = arith.constant 0 : i32
    return %c0_i32, %c0_i32_0 : i32, i32
  }
}

</mosaic_0001>

<llo_original>
// kernel: tpu_custom_call.1
$region0: #{tpu_custom_call.1}
  #allocation0 [shape = 'u32[]', space=smem, size = 0x4, offset = 0x4, fixed_abs, tag = 'smem constant byte address 0x4 - core index']
  #allocation1 [shape = 'u32[72,128]{1,0:T(1,128)}', space=vmem, size = 0x9000, scoped, tag = 'internal scratch']
  #allocation2 [shape = 'bf16[32,192]{1,0:T(8,128)(2,1)}', space=vmem, size = 0x4000, scoped, tag = 'scratch operand']
  %s0 = inlined_call_operand.hbm [shape: bf16[32,64], index: 0, kind: input, shape index: {}]
  %s1 = inlined_call_operand.hbm [shape: bf16[64,64], index: 1, kind: input, shape index: {}]
  %s2 = inlined_call_operand.vmem [shape: f32[2,64], index: 2, kind: input, shape index: {}]
  %s3 = inlined_call_operand.vmem [shape: bf16[128,64], index: 3, kind: input, shape index: {}]
  %s4 = inlined_call_operand.vmem [shape: f32[2,64], index: 4, kind: input, shape index: {}]
  %s5 = inlined_call_operand.vmem [shape: bf16[192,128], index: 5, kind: input, shape index: {}]
  %s6 = inlined_call_operand.hbm [shape: f32[2,128], index: 6, kind: input, shape index: {}]
  %s7 = inlined_call_operand.hbm [shape: f32[32,128], index: 7, kind: output, shape index: {}]
  %s8 = sld [smem:[#allocation0]]
  $region50: #{tpu_custom_call.1} parent=0
    _
  %s10 = ssub.s32 1, %s8
  %s11 = scalar_select 0, %s10, %s8
  $region1: #{tpu_custom_call.1} parent=0
    #allocation3 [shape = 'u8[8192]{0}', space=vmem, size = 0x2000, scoped, tag = 'input window, operand 0, single buffered']
    #allocation4 [shape = 's32[1]{0}', space=sflag, size = 0x4, scoped, tag = 'scoped memory for tpu_custom_call.1']
    #allocation5 [shape = 's32[1]{0}', space=sflag, size = 0x4, scoped, tag = 'scoped memory for tpu_custom_call.1']
    #allocation6 [shape = 'u8[16384]{0}', space=vmem, size = 0x4000, scoped, tag = 'input window, operand 1, single buffered']
    #allocation7 [shape = 's32[1]{0}', space=sflag, size = 0x4, scoped, tag = 'scoped memory for tpu_custom_call.1']
    #allocation8 [shape = 'u8[1024]{0}', space=vmem, size = 0x400, scoped, tag = 'input window, operand 6, single buffered']
    #allocation9 [shape = 'u8[16384]{0}', space=vmem, size = 0x4000, scoped, tag = 'output window, operand 0, single buffered']
    %12 = vsyncpa [#allocation4], 0
    %13 = vsyncpa [#allocation7], 0
    %14 = vsyncpa [#allocation5], 0
    // Predicated region
    $region2: #{tpu_custom_call.1} parent=1 // pred_check
      _
    $region3: #{tpu_custom_call.1} parent=1 // pred_check_branch
      %16 = sbr.rel (0) target = $region5
    $region4: #{tpu_custom_call.1} parent=1 // pred_region
      %18 = vsyncadd [#allocation4], 0
      %s19 = sshll.u32 %s0, 4
      %s20 = int_to_ptr.hbm [resolvable:$true] %s19
      %s21 = sshll.u32 [#allocation3], 4
      %s22 = int_to_ptr.vmem [resolvable:$true] %s21
      %27 = dma.hbm_to_vmem [thread:$0]  %s20, 256, %s22, [#allocation4], 64, 64, 4
    $region5: #{tpu_custom_call.1} parent=1 // pred_fallthru
      _
    // Predicated region
    $region6: #{tpu_custom_call.1} parent=1 // pred_check
      _
    $region7: #{tpu_custom_call.1} parent=1 // pred_check_branch
      %29 = sbr.rel (0) target = $region9
    $region8: #{tpu_custom_call.1} parent=1 // pred_region
      %31 = vsyncadd [#allocation7], 0
      %s32 = sshll.u32 %s1, 4
      %s33 = int_to_ptr.hbm [resolvable:$true] %s32
      %s34 = sshll.u32 [#allocation6], 4
      %s35 = int_to_ptr.vmem [resolvable:$true] %s34
      %40 = dma.hbm_to_vmem [thread:$0]  %s33, 512, %s35, [#allocation7], 64, 64, 4
    $region9: #{tpu_custom_call.1} parent=1 // pred_fallthru
      _
    // Predicated region
    $region10: #{tpu_custom_call.1} parent=1 // pred_check
      _
    $region11: #{tpu_custom_call.1} parent=1 // pred_check_branch
      %42 = sbr.rel (0) target = $region13
    $region12: #{tpu_custom_call.1} parent=1 // pred_region
      _
    $region13: #{tpu_custom_call.1} parent=1 // pred_fallthru
      _
    // Predicated region
    $region14: #{tpu_custom_call.1} parent=1 // pred_check
      _
    $region15: #{tpu_custom_call.1} parent=1 // pred_check_branch
      %44 = sbr.rel (0) target = $region17
    $region16: #{tpu_custom_call.1} parent=1 // pred_region
      _
    $region17: #{tpu_custom_call.1} parent=1 // pred_fallthru
      _
    // Predicated region
    $region18: #{tpu_custom_call.1} parent=1 // pred_check
      _
    $region19: #{tpu_custom_call.1} parent=1 // pred_check_branch
      %46 = sbr.rel (0) target = $region21
    $region20: #{tpu_custom_call.1} parent=1 // pred_region
      _
    $region21: #{tpu_custom_call.1} parent=1 // pred_fallthru
      _
    // Predicated region
    $region22: #{tpu_custom_call.1} parent=1 // pred_check
      _
    $region23: #{tpu_custom_call.1} parent=1 // pred_check_branch
      %48 = sbr.rel (0) target = $region25
    $region24: #{tpu_custom_call.1} parent=1 // pred_region
      _
    $region25: #{tpu_custom_call.1} parent=1 // pred_fallthru
      _
    // Predicated region
    $region26: #{tpu_custom_call.1} parent=1 // pred_check
      _
    $region27: #{tpu_custom_call.1} parent=1 // pred_check_branch
      %50 = sbr.rel (0) target = $region29
    $region28: #{tpu_custom_call.1} parent=1 // pred_region
      %52 = vsyncadd [#allocation7], 0
      %s54 = sshll.u32 %s6, 4
      %s55 = int_to_ptr.hbm [resolvable:$true] %s54
      %s56 = sshll.u32 [#allocation8], 4
      %s57 = int_to_ptr.vmem [resolvable:$true] %s56
      %59 = dma.hbm_to_vmem [thread:$0]  %s55, 32, %s57, [#allocation7]
    $region29: #{tpu_custom_call.1} parent=1 // pred_fallthru
      _
    // Predicated region
    $region30: #{tpu_custom_call.1} parent=1 // pred_check
      _
    $region31: #{tpu_custom_call.1} parent=1 // pred_check_branch
      %61 = sbr.rel (0) target = $region33
    $region32: #{tpu_custom_call.1} parent=1 // pred_region
      %63 = dma.done [#allocation4], 256
    $region33: #{tpu_custom_call.1} parent=1 // pred_fallthru
      _
    // Predicated region
    $region34: #{tpu_custom_call.1} parent=1 // pred_check
      _
    $region35: #{tpu_custom_call.1} parent=1 // pred_check_branch
      %65 = sbr.rel (0) target = $region37
    $region36: #{tpu_custom_call.1} parent=1 // pred_region
      %67 = dma.done [#allocation7], 512
    $region37: #{tpu_custom_call.1} parent=1 // pred_fallthru
      _
    // Predicated region
    $region38: #{tpu_custom_call.1} parent=1 // pred_check
      _
    $region39: #{tpu_custom_call.1} parent=1 // pred_check_branch
      %69 = sbr.rel (0) target = $region41
    $region40: #{tpu_custom_call.1} parent=1 // pred_region
      %71 = dma.done [#allocation7], 32
    $region41: #{tpu_custom_call.1} parent=1 // pred_fallthru
      _
    %v73 = vld [vmem:[#allocation3] sm:$0xf]
    %v74 = vld [vmem:[#allocation3 + $0x4] sm:$0xf]
    %v75 = vld [vmem:[#allocation3 + $0x8] sm:$0xf]
    %v76 = vld [vmem:[#allocation3 + $0xc] sm:$0xf]
    %vm77 = vcmask 519168
    %78 = vst.msk [vmem:[#allocation2] sm:$0xf] %vm77, %v73
    %79 = vst.msk [vmem:[#allocation2 + $0x8] sm:$0xf] %vm77, %v74
    %80 = vst.msk [vmem:[#allocation2 + $0x10] sm:$0xf] %vm77, %v75
    %81 = vst.msk [vmem:[#allocation2 + $0x18] sm:$0xf] %vm77, %v76
    %v82 = vld [vmem:[#allocation2] sm:$0xf]
    %v83 = vld [vmem:[#allocation2 + $0x8] sm:$0xf]
    %v84 = vld [vmem:[#allocation2 + $0x10] sm:$0xf]
    %v85 = vld [vmem:[#allocation2 + $0x18] sm:$0xf]
    %v86 = vld [vmem:[#allocation6] sm:$0xf]
    %v87 = vld [vmem:[#allocation6 + $0x4] sm:$0xf]
    %v88 = vld [vmem:[#allocation6 + $0x8] sm:$0xf]
    %v89 = vld [vmem:[#allocation6 + $0xc] sm:$0xf]
    %v90 = vld [vmem:[#allocation6 + $0x10] sm:$0xf]
    %v91 = vld [vmem:[#allocation6 + $0x14] sm:$0xf]
    %v92 = vld [vmem:[#allocation6 + $0x18] sm:$0xf]
    %v93 = vld [vmem:[#allocation6 + $0x1c] sm:$0xf]
    %v98 = vunpack.c.l.b16 %v82
    %v99 = vunpack.c.l.b16 %v83
    %v100 = vunpack.c.l.b16 %v84
    %v101 = vunpack.c.l.b16 %v85
    %v102 = vpack.c.b16 %v99, %v98
    %v103 = vpack.c.b16 %v101, %v100
    %v112 = vunpack.c.l.b16 %v86
    %v113 = vunpack.c.l.b16 %v87
    %v114 = vunpack.c.l.b16 %v88
    %v115 = vunpack.c.l.b16 %v89
    %v116 = vunpack.c.l.b16 %v90
    %v117 = vunpack.c.l.b16 %v91
    %v118 = vunpack.c.l.b16 %v92
    %v119 = vunpack.c.l.b16 %v93
    %v120 = vpack.c.b16 %v113, %v112
    %v121 = vpack.c.b16 %v115, %v114
    %v122 = vpack.c.b16 %v117, %v116
    %v123 = vpack.c.b16 %v119, %v118
    %vm128 = vcmask 523264
    %v130 = vsel %vm128, %v102, 0
    %v133 = vsel %vm128, %v103, 0
    %135 = vmatpush.bf16.msra.mxu0 0
    %136 = vmatpush.bf16.msra.mxu0 0
    %137 = vmatpush.bf16.msra.mxu0 0
    %138 = vmatpush.bf16.msra.mxu0 0
    %139 = vmatpush.bf16.msra.mxu0 %v123
    %140 = vmatpush.bf16.msra.mxu0 %v122
    %141 = vmatpush.bf16.msra.mxu0 %v121
    %142 = vmatpush.bf16.msra.mxu0 %v120
    %143 = vmatmul.bf16.gmra.mxu0 %v130
    %v144 = vpop.f32.mrf.mxu0
    %v145 = vadd.f32 0.0, %v144
    %v146 = vpop.f32.mrf.mxu0
    %v147 = vadd.f32 0.0, %v146
    %148 = vmatmul.bf16.gmra.mxu0 %v133
    %v149 = vpop.f32.mrf.mxu0
    %v150 = vadd.f32 0.0, %v149
    %v151 = vpop.f32.mrf.mxu0
    %v152 = vadd.f32 0.0, %v151
    %153 = vdwg.mxu0
    %v154 = vld [vmem:[%s2] sm:$0x1]
    %v155 = vld [vmem:[%s2 + $0x1] sm:$0x1]
    %v156 = vsel %vm128, %v145, 0.0
    %v157 = vsel %vm128, %v147, 0.0
    %v158 = vadd.f32 %v156, %v157
    %v159 = vsel %vm128, %v150, 0.0
    %v160 = vadd.f32 %v158, %v159
    %v161 = vsel %vm128, %v152, 0.0
    %v162 = vadd.f32 %v160, %v161
    %v163 = vrot.slane %v162, 4
    %v164 = vadd.f32 %v162, %v163
    %v165 = vrot.slane %v164, 2
    %v166 = vadd.f32 %v164, %v165
    %v167 = vrot.slane %v166, 1
    %v168 = vadd.f32 %v166, %v167
    %v169 = vmul.f32 %v168, 0.03125
    %v170 = vmul.f32 %v145, %v145
    %v171 = vmul.f32 %v147, %v147
    %v172 = vmul.f32 %v150, %v150
    %v173 = vmul.f32 %v152, %v152
    %v174 = vsel %vm128, %v170, 0.0
    %v175 = vsel %vm128, %v171, 0.0
    %v176 = vadd.f32 %v174, %v175
    %v177 = vsel %vm128, %v172, 0.0
    %v178 = vadd.f32 %v176, %v177
    %v179 = vsel %vm128, %v173, 0.0
    %v180 = vadd.f32 %v178, %v179
    %v181 = vrot.slane %v180, 4
    %v182 = vadd.f32 %v180, %v181
    %v183 = vrot.slane %v182, 2
    %v184 = vadd.f32 %v182, %v183
    %v185 = vrot.slane %v184, 1
    %v186 = vadd.f32 %v184, %v185
    %v187 = vmul.f32 %v186, 0.03125
    %v188 = vmul.f32 %v169, %v169
    %v189 = vsub.f32 %v187, %v188
    %v190 = vmax.f32 %v189, 0.0
    %v191 = vadd.f32 %v190, 1e-05
    %v192 = vrsqrt.pop %v191
    %v193 = vmul.f32 %v192, %v191
    %v194 = vmul.f32 %v193, %v192
    %v195 = vmul.f32 0.5, %v194
    %v196 = vsub.f32 1.5, %v195
    %v197 = vmul.f32 %v192, %v196
    %vm198 = vweird.f32 %v191
    %vm199 = vweird.f32 %v192
    %vm200 = vmor %vm198, %vm199
    %v201 = vsel %vm200, %v192, %v197
    %v202 = vmul.f32 %v154, %v201
    %v203 = vmul.f32 %v169, %v202
    %v204 = vsub.f32 %v155, %v203
    %v205 = vperm.slane %v202, 0
    %v206 = vmul.f32 %v145, %v205
    %v207 = vmul.f32 %v147, %v205
    %v208 = vmul.f32 %v150, %v205
    %v209 = vmul.f32 %v152, %v205
    %v210 = vperm.slane %v204, 0
    %v211 = vadd.f32 %v206, %v210
    %v212 = vadd.f32 %v207, %v210
    %v213 = vadd.f32 %v208, %v210
    %v214 = vadd.f32 %v209, %v210
    %v215 = vmul.f32 %v211, 0.2
    %v216 = vmul.f32 %v212, 0.2
    %v217 = vmul.f32 %v213, 0.2
    %v218 = vmul.f32 %v214, 0.2
    %v219 = vmax.f32 %v211, %v215
    %v220 = vmax.f32 %v212, %v216
    %v221 = vmax.f32 %v213, %v217
    %v222 = vmax.f32 %v214, %v218
    %v223 = vpack.c.bf16 %v219, %v219
    %v224 = vpack.c.bf16 %v220, %v220
    %v225 = vpack.c.bf16 %v221, %v221
    %v226 = vpack.c.bf16 %v222, %v222
    %231 = vrot.lane.b32.xlu0 %v223, 64
    %v232 = vpop.permute.xlu0 %231
    %233 = vrot.lane.b32.xlu0 %v224, 64
    %v234 = vpop.permute.xlu0 %233
    %235 = vrot.lane.b32.xlu0 %v225, 64
    %v236 = vpop.permute.xlu0 %235
    %237 = vrot.lane.b32.xlu0 %v226, 64
    %v238 = vpop.permute.xlu0 %237
    %vm243 = vcmask 1043968
    %244 = vst.msk [vmem:[#allocation2] sm:$0xf] %vm243, %v232
    %245 = vst.msk [vmem:[#allocation2 + $0x8] sm:$0xf] %vm243, %v234
    %246 = vst.msk [vmem:[#allocation2 + $0x10] sm:$0xf] %vm243, %v236
    %247 = vst.msk [vmem:[#allocation2 + $0x18] sm:$0xf] %vm243, %v238
    %v248 = vld [vmem:[#allocation2] sm:$0xf]
    %v249 = vld [vmem:[#allocation2 + $0x8] sm:$0xf]
    %v250 = vld [vmem:[#allocation2 + $0x10] sm:$0xf]
    %v251 = vld [vmem:[#allocation2 + $0x18] sm:$0xf]
    %v252 = vld [vmem:[%s3] sm:$0xf]
    %v253 = vld [vmem:[%s3 + $0x4] sm:$0xf]
    %v254 = vld [vmem:[%s3 + $0x8] sm:$0xf]
    %v255 = vld [vmem:[%s3 + $0xc] sm:$0xf]
    %v256 = vld [vmem:[%s3 + $0x10] sm:$0xf]
    %v257 = vld [vmem:[%s3 + $0x14] sm:$0xf]
    %v258 = vld [vmem:[%s3 + $0x18] sm:$0xf]
    %v259 = vld [vmem:[%s3 + $0x1c] sm:$0xf]
    %v260 = vld [vmem:[%s3 + $0x20] sm:$0xf]
    %v261 = vld [vmem:[%s3 + $0x24] sm:$0xf]
    %v262 = vld [vmem:[%s3 + $0x28] sm:$0xf]
    %v263 = vld [vmem:[%s3 + $0x2c] sm:$0xf]
    %v264 = vld [vmem:[%s3 + $0x30] sm:$0xf]
    %v265 = vld [vmem:[%s3 + $0x34] sm:$0xf]
    %v266 = vld [vmem:[%s3 + $0x38] sm:$0xf]
    %v267 = vld [vmem:[%s3 + $0x3c] sm:$0xf]
    %v272 = vunpack.c.l.b16 %v248
    %v273 = vunpack.c.l.b16 %v249
    %v274 = vunpack.c.l.b16 %v250
    %v275 = vunpack.c.l.b16 %v251
    %v276 = vpack.c.b16 %v273, %v272
    %v277 = vpack.c.b16 %v275, %v274
    %v296 = vunpack.c.l.b16 %v252
    %v297 = vunpack.c.l.b16 %v253
    %v298 = vunpack.c.l.b16 %v254
    %v299 = vunpack.c.l.b16 %v255
    %v300 = vunpack.c.l.b16 %v256
    %v301 = vunpack.c.l.b16 %v257
    %v302 = vunpack.c.l.b16 %v258
    %v303 = vunpack.c.l.b16 %v259
    %v304 = vunpack.c.l.b16 %v260
    %v305 = vunpack.c.l.b16 %v261
    %v306 = vunpack.c.l.b16 %v262
    %v307 = vunpack.c.l.b16 %v263
    %v308 = vunpack.c.l.b16 %v264
    %v309 = vunpack.c.l.b16 %v265
    %v310 = vunpack.c.l.b16 %v266
    %v311 = vunpack.c.l.b16 %v267
    %v312 = vpack.c.b16 %v297, %v296
    %v313 = vpack.c.b16 %v299, %v298
    %v314 = vpack.c.b16 %v301, %v300
    %v315 = vpack.c.b16 %v303, %v302
    %v316 = vpack.c.b16 %v305, %v304
    %v317 = vpack.c.b16 %v307, %v306
    %v318 = vpack.c.b16 %v309, %v308
    %v319 = vpack.c.b16 %v311, %v310
    %328 = vmatpush.bf16.msra.mxu0 %v319
    %329 = vmatpush.bf16.msra.mxu0 %v318
    %330 = vmatpush.bf16.msra.mxu0 %v317
    %331 = vmatpush.bf16.msra.mxu0 %v316
    %332 = vmatpush.bf16.msra.mxu0 %v315
    %333 = vmatpush.bf16.msra.mxu0 %v314
    %334 = vmatpush.bf16.msra.mxu0 %v313
    %335 = vmatpush.bf16.msra.mxu0 %v312
    %336 = vmatmul.bf16.gmra.mxu0 %v276
    %v337 = vpop.f32.mrf.mxu0
    %v338 = vadd.f32 0.0, %v337
    %v339 = vpop.f32.mrf.mxu0
    %v340 = vadd.f32 0.0, %v339
    %341 = vmatmul.bf16.gmra.mxu0 %v277
    %v342 = vpop.f32.mrf.mxu0
    %v343 = vadd.f32 0.0, %v342
    %v344 = vpop.f32.mrf.mxu0
    %v345 = vadd.f32 0.0, %v344
    %346 = vdwg.mxu0
    %v347 = vld [vmem:[%s4] sm:$0x1]
    %v348 = vld [vmem:[%s4 + $0x1] sm:$0x1]
    %v349 = vsel %vm128, %v338, 0.0
    %v350 = vsel %vm128, %v340, 0.0
    %v351 = vadd.f32 %v349, %v350
    %v352 = vsel %vm128, %v343, 0.0
    %v353 = vadd.f32 %v351, %v352
    %v354 = vsel %vm128, %v345, 0.0
    %v355 = vadd.f32 %v353, %v354
    %v356 = vrot.slane %v355, 4
    %v357 = vadd.f32 %v355, %v356
    %v358 = vrot.slane %v357, 2
    %v359 = vadd.f32 %v357, %v358
    %v360 = vrot.slane %v359, 1
    %v361 = vadd.f32 %v359, %v360
    %v362 = vmul.f32 %v361, 0.03125
    %v363 = vmul.f32 %v338, %v338
    %v364 = vmul.f32 %v340, %v340
    %v365 = vmul.f32 %v343, %v343
    %v366 = vmul.f32 %v345, %v345
    %v367 = vsel %vm128, %v363, 0.0
    %v368 = vsel %vm128, %v364, 0.0
    %v369 = vadd.f32 %v367, %v368
    %v370 = vsel %vm128, %v365, 0.0
    %v371 = vadd.f32 %v369, %v370
    %v372 = vsel %vm128, %v366, 0.0
    %v373 = vadd.f32 %v371, %v372
    %v374 = vrot.slane %v373, 4
    %v375 = vadd.f32 %v373, %v374
    %v376 = vrot.slane %v375, 2
    %v377 = vadd.f32 %v375, %v376
    %v378 = vrot.slane %v377, 1
    %v379 = vadd.f32 %v377, %v378
    %v380 = vmul.f32 %v379, 0.03125
    %v381 = vmul.f32 %v362, %v362
    %v382 = vsub.f32 %v380, %v381
    %v383 = vmax.f32 %v382, 0.0
    %v384 = vadd.f32 %v383, 1e-05
    %v385 = vrsqrt.pop %v384
    %v386 = vmul.f32 %v385, %v384
    %v387 = vmul.f32 %v386, %v385
    %v388 = vmul.f32 0.5, %v387
    %v389 = vsub.f32 1.5, %v388
    %v390 = vmul.f32 %v385, %v389
    %vm391 = vweird.f32 %v384
    %vm392 = vweird.f32 %v385
    %vm393 = vmor %vm391, %vm392
    %v394 = vsel %vm393, %v385, %v390
    %v395 = vmul.f32 %v347, %v394
    %v396 = vmul.f32 %v362, %v395
    %v397 = vsub.f32 %v348, %v396
    %v398 = vperm.slane %v395, 0
    %v399 = vmul.f32 %v338, %v398
    %v400 = vmul.f32 %v340, %v398
    %v401 = vmul.f32 %v343, %v398
    %v402 = vmul.f32 %v345, %v398
    %v403 = vperm.slane %v397, 0
    %v404 = vadd.f32 %v399, %v403
    %v405 = vadd.f32 %v400, %v403
    %v406 = vadd.f32 %v401, %v403
    %v407 = vadd.f32 %v402, %v403
    %v408 = vmul.f32 %v404, 0.2
    %v409 = vmul.f32 %v405, 0.2
    %v410 = vmul.f32 %v406, 0.2
    %v411 = vmul.f32 %v407, 0.2
    %v412 = vmax.f32 %v404, %v408
    %v413 = vmax.f32 %v405, %v409
    %v414 = vmax.f32 %v406, %v410
    %v415 = vmax.f32 %v407, %v411
    %v416 = vpack.c.bf16 %v412, %v412
    %v417 = vpack.c.bf16 %v413, %v413
    %v418 = vpack.c.bf16 %v414, %v414
    %v419 = vpack.c.bf16 %v415, %v415
    %420 = vst.msk [vmem:[#allocation2 + $0x4] sm:$0xf] %vm77, %v416
    %421 = vst.msk [vmem:[#allocation2 + $0xc] sm:$0xf] %vm77, %v417
    %422 = vst.msk [vmem:[#allocation2 + $0x14] sm:$0xf] %vm77, %v418
    %423 = vst.msk [vmem:[#allocation2 + $0x1c] sm:$0xf] %vm77, %v419
    %v424 = vld [vmem:[#allocation2] sm:$0xff]
    %v425 = vld [vmem:[#allocation2 + $0x8] sm:$0xff]
    %v426 = vld [vmem:[#allocation2 + $0x10] sm:$0xff]
    %v427 = vld [vmem:[#allocation2 + $0x18] sm:$0xff]
    %v428 = vld [vmem:[%s5] sm:$0xf]
    %v429 = vld [vmem:[%s5 + $0x4] sm:$0xf]
    %v430 = vld [vmem:[%s5 + $0x8] sm:$0xf]
    %v431 = vld [vmem:[%s5 + $0xc] sm:$0xf]
    %v432 = vld [vmem:[%s5 + $0x10] sm:$0xf]
    %v433 = vld [vmem:[%s5 + $0x14] sm:$0xf]
    %v434 = vld [vmem:[%s5 + $0x18] sm:$0xf]
    %v435 = vld [vmem:[%s5 + $0x1c] sm:$0xf]
    %v436 = vld [vmem:[%s5 + $0x20] sm:$0xf]
    %v437 = vld [vmem:[%s5 + $0x24] sm:$0xf]
    %v438 = vld [vmem:[%s5 + $0x28] sm:$0xf]
    %v439 = vld [vmem:[%s5 + $0x2c] sm:$0xf]
    %v440 = vld [vmem:[%s5 + $0x30] sm:$0xf]
    %v441 = vld [vmem:[%s5 + $0x34] sm:$0xf]
    %v442 = vld [vmem:[%s5 + $0x38] sm:$0xf]
    %v443 = vld [vmem:[%s5 + $0x3c] sm:$0xf]
    %v444 = vld [vmem:[%s5 + $0x40] sm:$0xf]
    %v445 = vld [vmem:[%s5 + $0x44] sm:$0xf]
    %v446 = vld [vmem:[%s5 + $0x48] sm:$0xf]
    %v447 = vld [vmem:[%s5 + $0x4c] sm:$0xf]
    %v448 = vld [vmem:[%s5 + $0x50] sm:$0xf]
    %v449 = vld [vmem:[%s5 + $0x54] sm:$0xf]
    %v450 = vld [vmem:[%s5 + $0x58] sm:$0xf]
    %v451 = vld [vmem:[%s5 + $0x5c] sm:$0xf]
    %v456 = vunpack.c.l.b16 %v424
    %v457 = vunpack.c.h.b16 %v424
    %v458 = vunpack.c.l.b16 %v425
    %v459 = vunpack.c.h.b16 %v425
    %v460 = vunpack.c.l.b16 %v426
    %v461 = vunpack.c.h.b16 %v426
    %v462 = vunpack.c.l.b16 %v427
    %v463 = vunpack.c.h.b16 %v427
    %v464 = vpack.c.b16 %v458, %v456
    %v465 = vpack.c.b16 %v459, %v457
    %v466 = vpack.c.b16 %v462, %v460
    %v467 = vpack.c.b16 %v463, %v461
    %v494 = vunpack.c.l.b16 %v428
    %v495 = vunpack.c.l.b16 %v429
    %v496 = vunpack.c.l.b16 %v430
    %v497 = vunpack.c.l.b16 %v431
    %v498 = vunpack.c.l.b16 %v432
    %v499 = vunpack.c.l.b16 %v433
    %v500 = vunpack.c.l.b16 %v434
    %v501 = vunpack.c.l.b16 %v435
    %v502 = vunpack.c.l.b16 %v436
    %v503 = vunpack.c.l.b16 %v437
    %v504 = vunpack.c.l.b16 %v438
    %v505 = vunpack.c.l.b16 %v439
    %v506 = vunpack.c.l.b16 %v440
    %v507 = vunpack.c.l.b16 %v441
    %v508 = vunpack.c.l.b16 %v442
    %v509 = vunpack.c.l.b16 %v443
    %v510 = vunpack.c.l.b16 %v444
    %v511 = vunpack.c.l.b16 %v445
    %v512 = vunpack.c.l.b16 %v446
    %v513 = vunpack.c.l.b16 %v447
    %v514 = vunpack.c.l.b16 %v448
    %v515 = vunpack.c.l.b16 %v449
    %v516 = vunpack.c.l.b16 %v450
    %v517 = vunpack.c.l.b16 %v451
    %v518 = vpack.c.b16 %v495, %v494
    %v519 = vpack.c.b16 %v497, %v496
    %v520 = vpack.c.b16 %v499, %v498
    %v521 = vpack.c.b16 %v501, %v500
    %v522 = vpack.c.b16 %v503, %v502
    %v523 = vpack.c.b16 %v505, %v504
    %v524 = vpack.c.b16 %v507, %v506
    %v525 = vpack.c.b16 %v509, %v508
    %v526 = vpack.c.b16 %v511, %v510
    %v527 = vpack.c.b16 %v513, %v512
    %v528 = vpack.c.b16 %v515, %v514
    %v529 = vpack.c.b16 %v517, %v516
    %v543 = vsel %vm128, %v465, 0
    %v546 = vsel %vm128, %v467, 0
    %548 = vmatpush.bf16.msra.mxu0 %v525
    %549 = vmatpush.bf16.msra.mxu0 %v524
    %550 = vmatpush.bf16.msra.mxu0 %v523
    %551 = vmatpush.bf16.msra.mxu0 %v522
    %552 = vmatpush.bf16.msra.mxu0 %v521
    %553 = vmatpush.bf16.msra.mxu0 %v520
    %554 = vmatpush.bf16.msra.mxu0 %v519
    %555 = vmatpush.bf16.msra.mxu0 %v518
    %556 = vmatmul.bf16.gmra.mxu0 %v464
    %v557 = vpop.f32.mrf.mxu0
    %v558 = vadd.f32 0.0, %v557
    %v559 = vpop.f32.mrf.mxu0
    %v560 = vadd.f32 0.0, %v559
    %561 = vmatmul.bf16.gmra.mxu0 %v466
    %v562 = vpop.f32.mrf.mxu0
    %v563 = vadd.f32 0.0, %v562
    %v564 = vpop.f32.mrf.mxu0
    %v565 = vadd.f32 0.0, %v564
    %566 = vdwg.mxu0
    %567 = vmatpush.bf16.msra.mxu0 0
    %568 = vmatpush.bf16.msra.mxu0 0
    %569 = vmatpush.bf16.msra.mxu0 0
    %570 = vmatpush.bf16.msra.mxu0 0
    %571 = vmatpush.bf16.msra.mxu0 %v529
    %572 = vmatpush.bf16.msra.mxu0 %v528
    %573 = vmatpush.bf16.msra.mxu0 %v527
    %574 = vmatpush.bf16.msra.mxu0 %v526
    %575 = vmatmul.bf16.gmra.mxu0 %v543
    %v576 = vpop.f32.mrf.mxu0
    %v577 = vadd.f32 %v558, %v576
    %v578 = vpop.f32.mrf.mxu0
    %v579 = vadd.f32 %v560, %v578
    %580 = vmatmul.bf16.gmra.mxu0 %v546
    %v581 = vpop.f32.mrf.mxu0
    %v582 = vadd.f32 %v563, %v581
    %v583 = vpop.f32.mrf.mxu0
    %v584 = vadd.f32 %v565, %v583
    %585 = vdwg.mxu0
    %v586 = vld [vmem:[#allocation8] sm:$0x1]
    %v587 = vld [vmem:[#allocation8 + $0x1] sm:$0x1]
    %v588 = vadd.f32 %v577, %v579
    %v589 = vadd.f32 %v588, %v582
    %v590 = vadd.f32 %v589, %v584
    %v591 = vrot.slane %v590, 4
    %v592 = vadd.f32 %v590, %v591
    %v593 = vrot.slane %v592, 2
    %v594 = vadd.f32 %v592, %v593
    %v595 = vrot.slane %v594, 1
    %v596 = vadd.f32 %v594, %v595
    %v597 = vmul.f32 %v596, 0.03125
    %v598 = vmul.f32 %v577, %v577
    %v599 = vmul.f32 %v579, %v579
    %v600 = vmul.f32 %v582, %v582
    %v601 = vmul.f32 %v584, %v584
    %v602 = vadd.f32 %v598, %v599
    %v603 = vadd.f32 %v602, %v600
    %v604 = vadd.f32 %v603, %v601
    %v605 = vrot.slane %v604, 4
    %v606 = vadd.f32 %v604, %v605
    %v607 = vrot.slane %v606, 2
    %v608 = vadd.f32 %v606, %v607
    %v609 = vrot.slane %v608, 1
    %v610 = vadd.f32 %v608, %v609
    %v611 = vmul.f32 %v610, 0.03125
    %v612 = vmul.f32 %v597, %v597
    %v613 = vsub.f32 %v611, %v612
    %v614 = vmax.f32 %v613, 0.0
    %v615 = vadd.f32 %v614, 1e-05
    %v616 = vrsqrt.pop %v615
    %v617 = vmul.f32 %v616, %v615
    %v618 = vmul.f32 %v617, %v616
    %v619 = vmul.f32 0.5, %v618
    %v620 = vsub.f32 1.5, %v619
    %v621 = vmul.f32 %v616, %v620
    %vm622 = vweird.f32 %v615
    %vm623 = vweird.f32 %v616
    %vm624 = vmor %vm622, %vm623
    %v625 = vsel %vm624, %v616, %v621
    %v626 = vmul.f32 %v586, %v625
    %v627 = vmul.f32 %v597, %v626
    %v628 = vsub.f32 %v587, %v627
    %v629 = vperm.slane %v626, 0
    %v630 = vmul.f32 %v577, %v629
    %v631 = vmul.f32 %v579, %v629
    %v632 = vmul.f32 %v582, %v629
    %v633 = vmul.f32 %v584, %v629
    %v634 = vperm.slane %v628, 0
    %v635 = vadd.f32 %v630, %v634
    %v636 = vadd.f32 %v631, %v634
    %v637 = vadd.f32 %v632, %v634
    %v638 = vadd.f32 %v633, %v634
    %v639 = vmul.f32 %v635, 0.2
    %v640 = vmul.f32 %v636, 0.2
    %v641 = vmul.f32 %v637, 0.2
    %v642 = vmul.f32 %v638, 0.2
    %v643 = vmax.f32 %v635, %v639
    %v644 = vmax.f32 %v636, %v640
    %v645 = vmax.f32 %v637, %v641
    %v646 = vmax.f32 %v638, %v642
    %647 = vst [vmem:[#allocation9] sm:$0xff] %v643
    %648 = vst [vmem:[#allocation9 + $0x8] sm:$0xff] %v644
    %649 = vst [vmem:[#allocation9 + $0x10] sm:$0xff] %v645
    %650 = vst [vmem:[#allocation9 + $0x18] sm:$0xff] %v646
    // Predicated region
    $region42: #{tpu_custom_call.1} parent=1 // pred_check
      _
    $region43: #{tpu_custom_call.1} parent=1 // pred_check_branch
      %652 = sbr.rel (0) target = $region45
    $region44: #{tpu_custom_call.1} parent=1 // pred_region
      %654 = vsyncadd [#allocation5], 0
      %s655 = sshll.u32 [#allocation9], 4
      %s656 = int_to_ptr.vmem [resolvable:$true] %s655
      %s657 = sshll.u32 %s7, 4
      %s658 = int_to_ptr.hbm [resolvable:$true] %s657
      %663 = dma.vmem_to_hbm [thread:$0]  %s656, 512, %s658, [#allocation5], 128, 128, 8
    $region45: #{tpu_custom_call.1} parent=1 // pred_fallthru
      _
    // Predicated region
    $region46: #{tpu_custom_call.1} parent=1 // pred_check
      _
    $region47: #{tpu_custom_call.1} parent=1 // pred_check_branch
      %665 = sbr.rel (0) target = $region49
    $region48: #{tpu_custom_call.1} parent=1 // pred_region
      %667 = dma.done [#allocation5], 512
    $region49: #{tpu_custom_call.1} parent=1 // pred_fallthru
      _
    %668 = vsyncpa [#allocation4], 1
    %669 = vsyncpa [#allocation7], 1
    %670 = vsyncpa [#allocation5], 1

// kernel: tpu_custom_call.1
$region0: #{tpu_custom_call.1}
  #allocation0 [shape = 'u32[]', space=smem, size = 0x4, offset = 0x4, fixed_abs, tag = 'smem constant byte address 0x4 - core index']
  #allocation1 [shape = 'u32[72,128]{1,0:T(1,128)}', space=vmem, size = 0x9000, scoped, tag = 'internal scratch']
  #allocation2 [shape = 'bf16[32,192]{1,0:T(8,128)(2,1)}', space=vmem, size = 0x4000, scoped, tag = 'scratch operand']
  %s0 = inlined_call_operand.hbm [shape: bf16[32,64], index: 0, kind: input, shape index: {}]
  %s1 = inlined_call_operand.hbm [shape: bf16[64,64], index: 1, kind: input, shape index: {}]
  %s2 = inlined_call_operand.vmem [shape: f32[2,64], index: 2, kind: input, shape index: {}]
  %s3 = inlined_call_operand.vmem [shape: bf16[128,64], index: 3, kind: input, shape index: {}]
  %s4 = inlined_call_operand.vmem [shape: f32[2,64], index: 4, kind: input, shape index: {}]
  %s5 = inlined_call_operand.vmem [shape: bf16[192,128], index: 5, kind: input, shape index: {}]
  %s6 = inlined_call_operand.hbm [shape: f32[2,128], index: 6, kind: input, shape index: {}]
  %s7 = inlined_call_operand.hbm [shape: f32[32,128], index: 7, kind: output, shape index: {}]
  %s8 = sld [smem:[#allocation0]]
  $region50: #{tpu_custom_call.1} parent=0
    _
  %s10 = ssub.s32 1, %s8
  %s11 = scalar_select 0, %s10, %s8
  $region1: #{tpu_custom_call.1} parent=0
    #allocation3 [shape = 'u8[8192]{0}', space=vmem, size = 0x2000, scoped, tag = 'input window, operand 0, single buffered']
    #allocation4 [shape = 's32[1]{0}', space=sflag, size = 0x4, scoped, tag = 'scoped memory for tpu_custom_call.1']
    #allocation5 [shape = 's32[1]{0}', space=sflag, size = 0x4, scoped, tag = 'scoped memory for tpu_custom_call.1']
    #allocation6 [shape = 'u8[16384]{0}', space=vmem, size = 0x4000, scoped, tag = 'input window, operand 1, single buffered']
    #allocation7 [shape = 's32[1]{0}', space=sflag, size = 0x4, scoped, tag = 'scoped memory for tpu_custom_call.1']
    #allocation8 [shape = 'u8[1024]{0}', space=vmem, size = 0x400, scoped, tag = 'input window, operand 6, single buffered']
    #allocation9 [shape = 'u8[16384]{0}', space=vmem, size = 0x4000, scoped, tag = 'output window, operand 0, single buffered']
    %12 = vsyncpa [#allocation4], 0
    %13 = vsyncpa [#allocation7], 0
    %14 = vsyncpa [#allocation5], 0
    // Predicated region
    $region2: #{tpu_custom_call.1} parent=1 // pred_check
      _
    $region3: #{tpu_custom_call.1} parent=1 // pred_check_branch
      %16 = sbr.rel (0) target = $region5
    $region4: #{tpu_custom_call.1} parent=1 // pred_region
      %18 = vsyncadd [#allocation4], 0
      %s19 = sshll.u32 %s0, 4
      %s20 = int_to_ptr.hbm [resolvable:$true] %s19
      %s21 = sshll.u32 [#allocation3], 4
      %s22 = int_to_ptr.vmem [resolvable:$true] %s21
      %27 = dma.hbm_to_vmem [thread:$0]  %s20, 256, %s22, [#allocation4], 64, 64, 4
    $region5: #{tpu_custom_call.1} parent=1 // pred_fallthru
      _
    // Predicated region
    $region6: #{tpu_custom_call.1} parent=1 // pred_check
      _
    $region7: #{tpu_custom_call.1} parent=1 // pred_check_branch
      %29 = sbr.rel (0) target = $region9
    $region8: #{tpu_custom_call.1} parent=1 // pred_region
      %31 = vsyncadd [#allocation7], 0
      %s32 = sshll.u32 %s1, 4
      %s33 = int_to_ptr.hbm [resolvable:$true] %s32
      %s34 = sshll.u32 [#allocation6], 4
      %s35 = int_to_ptr.vmem [resolvable:$true] %s34
      %40 = dma.hbm_to_vmem [thread:$0]  %s33, 512, %s35, [#allocation7], 64, 64, 4
    $region9: #{tpu_custom_call.1} parent=1 // pred_fallthru
      _
    // Predicated region
    $region10: #{tpu_custom_call.1} parent=1 // pred_check
      _
    $region11: #{tpu_custom_call.1} parent=1 // pred_check_branch
      %42 = sbr.rel (0) target = $region13
    $region12: #{tpu_custom_call.1} parent=1 // pred_region
      _
    $region13: #{tpu_custom_call.1} parent=1 // pred_fallthru
      _
    // Predicated region
    $region14: #{tpu_custom_call.1} parent=1 // pred_check
      _
    $region15: #{tpu_custom_call.1} parent=1 // pred_check_branch
      %44 = sbr.rel (0) target = $region17
    $region16: #{tpu_custom_call.1} parent=1 // pred_region
      _
    $region17: #{tpu_custom_call.1} parent=1 // pred_fallthru
      _
    // Predicated region
    $region18: #{tpu_custom_call.1} parent=1 // pred_check
      _
    $region19: #{tpu_custom_call.1} parent=1 // pred_check_branch
      %46 = sbr.rel (0) target = $region21
    $region20: #{tpu_custom_call.1} parent=1 // pred_region
      _
    $region21: #{tpu_custom_call.1} parent=1 // pred_fallthru
      _
    // Predicated region
    $region22: #{tpu_custom_call.1} parent=1 // pred_check
      _
    $region23: #{tpu_custom_call.1} parent=1 // pred_check_branch
      %48 = sbr.rel (0) target = $region25
    $region24: #{tpu_custom_call.1} parent=1 // pred_region
      _
    $region25: #{tpu_custom_call.1} parent=1 // pred_fallthru
      _
    // Predicated region
    $region26: #{tpu_custom_call.1} parent=1 // pred_check
      _
    $region27: #{tpu_custom_call.1} parent=1 // pred_check_branch
      %50 = sbr.rel (0) target = $region29
    $region28: #{tpu_custom_call.1} parent=1 // pred_region
      %52 = vsyncadd [#allocation7], 0
      %s54 = sshll.u32 %s6, 4
      %s55 = int_to_ptr.hbm [resolvable:$true] %s54
      %s56 = sshll.u32 [#allocation8], 4
      %s57 = int_to_ptr.vmem [resolvable:$true] %s56
      %59 = dma.hbm_to_vmem [thread:$0]  %s55, 32, %s57, [#allocation7]
    $region29: #{tpu_custom_call.1} parent=1 // pred_fallthru
      _
    // Predicated region
    $region30: #{tpu_custom_call.1} parent=1 // pred_check
      _
    $region31: #{tpu_custom_call.1} parent=1 // pred_check_branch
      %61 = sbr.rel (0) target = $region33
    $region32: #{tpu_custom_call.1} parent=1 // pred_region
      %63 = dma.done [#allocation4], 256
    $region33: #{tpu_custom_call.1} parent=1 // pred_fallthru
      _
    // Predicated region
    $region34: #{tpu_custom_call.1} parent=1 // pred_check
      _
    $region35: #{tpu_custom_call.1} parent=1 // pred_check_branch
      %65 = sbr.rel (0) target = $region37
    $region36: #{tpu_custom_call.1} parent=1 // pred_region
      %67 = dma.done [#allocation7], 512
    $region37: #{tpu_custom_call.1} parent=1 // pred_fallthru
      _
    // Predicated region
    $region38: #{tpu_custom_call.1} parent=1 // pred_check
      _
    $region39: #{tpu_custom_call.1} parent=1 // pred_check_branch
      %69 = sbr.rel (0) target = $region41
    $region40: #{tpu_custom_call.1} parent=1 // pred_region
      %71 = dma.done [#allocation7], 32
    $region41: #{tpu_custom_call.1} parent=1 // pred_fallthru
      _
    %v73 = vld [vmem:[#allocation3] sm:$0xf]
    %v74 = vld [vmem:[#allocation3 + $0x4] sm:$0xf]
    %v75 = vld [vmem:[#allocation3 + $0x8] sm:$0xf]
    %v76 = vld [vmem:[#allocation3 + $0xc] sm:$0xf]
    %vm77 = vcmask 519168
    %78 = vst.msk [vmem:[#allocation2] sm:$0xf] %vm77, %v73
    %79 = vst.msk [vmem:[#allocation2 + $0x8] sm:$0xf] %vm77, %v74
    %80 = vst.msk [vmem:[#allocation2 + $0x10] sm:$0xf] %vm77, %v75
    %81 = vst.msk [vmem:[#allocation2 + $0x18] sm:$0xf] %vm77, %v76
    %v82 = vld [vmem:[#allocation2] sm:$0xf]
    %v83 = vld [vmem:[#allocation2 + $0x8] sm:$0xf]
    %v84 = vld [vmem:[#allocation2 + $0x10] sm:$0xf]
    %v85 = vld [vmem:[#allocation2 + $0x18] sm:$0xf]
    %v86 = vld [vmem:[#allocation6] sm:$0xf]
    %v87 = vld [vmem:[#allocation6 + $0x4] sm:$0xf]
    %v88 = vld [vmem:[#allocation6 + $0x8] sm:$0xf]
    %v89 = vld [vmem:[#allocation6 + $0xc] sm:$0xf]
    %v90 = vld [vmem:[#allocation6 + $0x10] sm:$0xf]
    %v91 = vld [vmem:[#allocation6 + $0x14] sm:$0xf]
    %v92 = vld [vmem:[#allocation6 + $0x18] sm:$0xf]
    %v93 = vld [vmem:[#allocation6 + $0x1c] sm:$0xf]
    %v98 = vunpack.c.l.b16 %v82
    %v99 = vunpack.c.l.b16 %v83
    %v100 = vunpack.c.l.b16 %v84
    %v101 = vunpack.c.l.b16 %v85
    %v102 = vpack.c.b16 %v99, %v98
    %v103 = vpack.c.b16 %v101, %v100
    %v112 = vunpack.c.l.b16 %v86
    %v113 = vunpack.c.l.b16 %v87
    %v114 = vunpack.c.l.b16 %v88
    %v115 = vunpack.c.l.b16 %v89
    %v116 = vunpack.c.l.b16 %v90
    %v117 = vunpack.c.l.b16 %v91
    %v118 = vunpack.c.l.b16 %v92
    %v119 = vunpack.c.l.b16 %v93
    %v120 = vpack.c.b16 %v113, %v112
    %v121 = vpack.c.b16 %v115, %v114
    %v122 = vpack.c.b16 %v117, %v116
    %v123 = vpack.c.b16 %v119, %v118
    %vm128 = vcmask 523264
    %v130 = vsel %vm128, %v102, 0
    %v133 = vsel %vm128, %v103, 0
    %135 = vmatpush.bf16.msra.mxu0 0
    %136 = vmatpush.bf16.msra.mxu0 0
    %137 = vmatpush.bf16.msra.mxu0 0
    %138 = vmatpush.bf16.msra.mxu0 0
    %139 = vmatpush.bf16.msra.mxu0 %v123
    %140 = vmatpush.bf16.msra.mxu0 %v122
    %141 = vmatpush.bf16.msra.mxu0 %v121
    %142 = vmatpush.bf16.msra.mxu0 %v120
    %143 = vmatmul.bf16.gmra.mxu0 %v130
    %v144 = vpop.f32.mrf.mxu0
    %v145 = vadd.f32 0.0, %v144
    %v146 = vpop.f32.mrf.mxu0
    %v147 = vadd.f32 0.0, %v146
    %148 = vmatmul.bf16.gmra.mxu0 %v133
    %v149 = vpop.f32.mrf.mxu0
    %v150 = vadd.f32 0.0, %v149
    %v151 = vpop.f32.mrf.mxu0
    %v152 = vadd.f32 0.0, %v151
    %153 = vdwg.mxu0
    %v154 = vld [vmem:[%s2] sm:$0x1]
    %v155 = vld [vmem:[%s2 + $0x1] sm:$0x1]
    %v156 = vsel %vm128, %v145, 0.0
    %v157 = vsel %vm128, %v147, 0.0
    %v158 = vadd.f32 %v156, %v157
    %v159 = vsel %vm128, %v150, 0.0
    %v160 = vadd.f32 %v158, %v159
    %v161 = vsel %vm128, %v152, 0.0
    %v162 = vadd.f32 %v160, %v161
    %v163 = vrot.slane %v162, 4
    %v164 = vadd.f32 %v162, %v163
    %v165 = vrot.slane %v164, 2
    %v166 = vadd.f32 %v164, %v165
    %v167 = vrot.slane %v166, 1
    %v168 = vadd.f32 %v166, %v167
    %v169 = vmul.f32 %v168, 0.03125
    %v170 = vmul.f32 %v145, %v145
    %v171 = vmul.f32 %v147, %v147
    %v172 = vmul.f32 %v150, %v150
    %v173 = vmul.f32 %v152, %v152
    %v174 = vsel %vm128, %v170, 0.0
    %v175 = vsel %vm128, %v171, 0.0
    %v176 = vadd.f32 %v174, %v175
    %v177 = vsel %vm128, %v172, 0.0
    %v178 = vadd.f32 %v176, %v177
    %v179 = vsel %vm128, %v173, 0.0
    %v180 = vadd.f32 %v178, %v179
    %v181 = vrot.slane %v180, 4
    %v182 = vadd.f32 %v180, %v181
    %v183 = vrot.slane %v182, 2
    %v184 = vadd.f32 %v182, %v183
    %v185 = vrot.slane %v184, 1
    %v186 = vadd.f32 %v184, %v185
    %v187 = vmul.f32 %v186, 0.03125
    %v188 = vmul.f32 %v169, %v169
    %v189 = vsub.f32 %v187, %v188
    %v190 = vmax.f32 %v189, 0.0
    %v191 = vadd.f32 %v190, 1e-05
    %v192 = vrsqrt.pop %v191
    %v193 = vmul.f32 %v192, %v191
    %v194 = vmul.f32 %v193, %v192
    %v195 = vmul.f32 0.5, %v194
    %v196 = vsub.f32 1.5, %v195
    %v197 = vmul.f32 %v192, %v196
    %vm198 = vweird.f32 %v191
    %vm199 = vweird.f32 %v192
    %vm200 = vmor %vm198, %vm199
    %v201 = vsel %vm200, %v192, %v197
    %v202 = vmul.f32 %v154, %v201
    %v203 = vmul.f32 %v169, %v202
    %v204 = vsub.f32 %v155, %v203
    %v205 = vperm.slane %v202, 0
    %v206 = vmul.f32 %v145, %v205
    %v207 = vmul.f32 %v147, %v205
    %v208 = vmul.f32 %v150, %v205
    %v209 = vmul.f32 %v152, %v205
    %v210 = vperm.slane %v204, 0
    %v211 = vadd.f32 %v206, %v210
    %v212 = vadd.f32 %v207, %v210
    %v213 = vadd.f32 %v208, %v210
    %v214 = vadd.f32 %v209, %v210
    %v215 = vmul.f32 %v211, 0.2
    %v216 = vmul.f32 %v212, 0.2
    %v217 = vmul.f32 %v213, 0.2
    %v218 = vmul.f32 %v214, 0.2
    %v219 = vmax.f32 %v211, %v215
    %v220 = vmax.f32 %v212, %v216
    %v221 = vmax.f32 %v213, %v217
    %v222 = vmax.f32 %v214, %v218
    %v223 = vpack.c.bf16 %v219, %v219
    %v224 = vpack.c.bf16 %v220, %v220
    %v225 = vpack.c.bf16 %v221, %v221
    %v226 = vpack.c.bf16 %v222, %v222
    %231 = vrot.lane.b32.xlu0 %v223, 64
    %v232 = vpop.permute.xlu0 %231
    %233 = vrot.lane.b32.xlu0 %v224, 64
    %v234 = vpop.permute.xlu0 %233
    %235 = vrot.lane.b32.xlu0 %v225, 64
    %v236 = vpop.permute.xlu0 %235
    %237 = vrot.lane.b32.xlu0 %v226, 64
    %v238 = vpop.permute.xlu0 %237
    %vm243 = vcmask 1043968
    %244 = vst.msk [vmem:[#allocation2] sm:$0xf] %vm243, %v232
    %245 = vst.msk [vmem:[#allocation2 + $0x8] sm:$0xf] %vm243, %v234
    %246 = vst.msk [vmem:[#allocation2 + $0x10] sm:$0xf] %vm243, %v236
    %247 = vst.msk [vmem:[#allocation2 + $0x18] sm:$0xf] %vm243, %v238
    %v248 = vld [vmem:[#allocation2] sm:$0xf]
    %v249 = vld [vmem:[#allocation2 + $0x8] sm:$0xf]
    %v250 = vld [vmem:[#allocation2 + $0x10] sm:$0xf]
    %v251 = vld [vmem:[#allocation2 + $0x18] sm:$0xf]
    %v252 = vld [vmem:[%s3] sm:$0xf]
    %v253 = vld [vmem:[%s3 + $0x4] sm:$0xf]
    %v254 = vld [vmem:[%s3 + $0x8] sm:$0xf]
    %v255 = vld [vmem:[%s3 + $0xc] sm:$0xf]
    %v256 = vld [vmem:[%s3 + $0x10] sm:$0xf]
    %v257 = vld [vmem:[%s3 + $0x14] sm:$0xf]
    %v258 = vld [vmem:[%s3 + $0x18] sm:$0xf]
    %v259 = vld [vmem:[%s3 + $0x1c] sm:$0xf]
    %v260 = vld [vmem:[%s3 + $0x20] sm:$0xf]
    %v261 = vld [vmem:[%s3 + $0x24] sm:$0xf]
    %v262 = vld [vmem:[%s3 + $0x28] sm:$0xf]
    %v263 = vld [vmem:[%s3 + $0x2c] sm:$0xf]
    %v264 = vld [vmem:[%s3 + $0x30] sm:$0xf]
    %v265 = vld [vmem:[%s3 + $0x34] sm:$0xf]
    %v266 = vld [vmem:[%s3 + $0x38] sm:$0xf]
    %v267 = vld [vmem:[%s3 + $0x3c] sm:$0xf]
    %v272 = vunpack.c.l.b16 %v248
    %v273 = vunpack.c.l.b16 %v249
    %v274 = vunpack.c.l.b16 %v250
    %v275 = vunpack.c.l.b16 %v251
    %v276 = vpack.c.b16 %v273, %v272
    %v277 = vpack.c.b16 %v275, %v274
    %v296 = vunpack.c.l.b16 %v252
    %v297 = vunpack.c.l.b16 %v253
    %v298 = vunpack.c.l.b16 %v254
    %v299 = vunpack.c.l.b16 %v255
    %v300 = vunpack.c.l.b16 %v256
    %v301 = vunpack.c.l.b16 %v257
    %v302 = vunpack.c.l.b16 %v258
    %v303 = vunpack.c.l.b16 %v259
    %v304 = vunpack.c.l.b16 %v260
    %v305 = vunpack.c.l.b16 %v261
    %v306 = vunpack.c.l.b16 %v262
    %v307 = vunpack.c.l.b16 %v263
    %v308 = vunpack.c.l.b16 %v264
    %v309 = vunpack.c.l.b16 %v265
    %v310 = vunpack.c.l.b16 %v266
    %v311 = vunpack.c.l.b16 %v267
    %v312 = vpack.c.b16 %v297, %v296
    %v313 = vpack.c.b16 %v299, %v298
    %v314 = vpack.c.b16 %v301, %v300
    %v315 = vpack.c.b16 %v303, %v302
    %v316 = vpack.c.b16 %v305, %v304
    %v317 = vpack.c.b16 %v307, %v306
    %v318 = vpack.c.b16 %v309, %v308
    %v319 = vpack.c.b16 %v311, %v310
    %328 = vmatpush.bf16.msra.mxu0 %v319
    %329 = vmatpush.bf16.msra.mxu0 %v318
    %330 = vmatpush.bf16.msra.mxu0 %v317
    %331 = vmatpush.bf16.msra.mxu0 %v316
    %332 = vmatpush.bf16.msra.mxu0 %v315
    %333 = vmatpush.bf16.msra.mxu0 %v314
    %334 = vmatpush.bf16.msra.mxu0 %v313
    %335 = vmatpush.bf16.msra.mxu0 %v312
    %336 = vmatmul.bf16.gmra.mxu0 %v276
    %v337 = vpop.f32.mrf.mxu0
    %v338 = vadd.f32 0.0, %v337
    %v339 = vpop.f32.mrf.mxu0
    %v340 = vadd.f32 0.0, %v339
    %341 = vmatmul.bf16.gmra.mxu0 %v277
    %v342 = vpop.f32.mrf.mxu0
    %v343 = vadd.f32 0.0, %v342
    %v344 = vpop.f32.mrf.mxu0
    %v345 = vadd.f32 0.0, %v344
    %346 = vdwg.mxu0
    %v347 = vld [vmem:[%s4] sm:$0x1]
    %v348 = vld [vmem:[%s4 + $0x1] sm:$0x1]
    %v349 = vsel %vm128, %v338, 0.0
    %v350 = vsel %vm128, %v340, 0.0
    %v351 = vadd.f32 %v349, %v350
    %v352 = vsel %vm128, %v343, 0.0
    %v353 = vadd.f32 %v351, %v352
    %v354 = vsel %vm128, %v345, 0.0
    %v355 = vadd.f32 %v353, %v354
    %v356 = vrot.slane %v355, 4
    %v357 = vadd.f32 %v355, %v356
    %v358 = vrot.slane %v357, 2
    %v359 = vadd.f32 %v357, %v358
    %v360 = vrot.slane %v359, 1
    %v361 = vadd.f32 %v359, %v360
    %v362 = vmul.f32 %v361, 0.03125
    %v363 = vmul.f32 %v338, %v338
    %v364 = vmul.f32 %v340, %v340
    %v365 = vmul.f32 %v343, %v343
    %v366 = vmul.f32 %v345, %v345
    %v367 = vsel %vm128, %v363, 0.0
    %v368 = vsel %vm128, %v364, 0.0
    %v369 = vadd.f32 %v367, %v368
    %v370 = vsel %vm128, %v365, 0.0
    %v371 = vadd.f32 %v369, %v370
    %v372 = vsel %vm128, %v366, 0.0
    %v373 = vadd.f32 %v371, %v372
    %v374 = vrot.slane %v373, 4
    %v375 = vadd.f32 %v373, %v374
    %v376 = vrot.slane %v375, 2
    %v377 = vadd.f32 %v375, %v376
    %v378 = vrot.slane %v377, 1
    %v379 = vadd.f32 %v377, %v378
    %v380 = vmul.f32 %v379, 0.03125
    %v381 = vmul.f32 %v362, %v362
    %v382 = vsub.f32 %v380, %v381
    %v383 = vmax.f32 %v382, 0.0
    %v384 = vadd.f32 %v383, 1e-05
    %v385 = vrsqrt.pop %v384
    %v386 = vmul.f32 %v385, %v384
    %v387 = vmul.f32 %v386, %v385
    %v388 = vmul.f32 0.5, %v387
    %v389 = vsub.f32 1.5, %v388
    %v390 = vmul.f32 %v385, %v389
    %vm391 = vweird.f32 %v384
    %vm392 = vweird.f32 %v385
    %vm393 = vmor %vm391, %vm392
    %v394 = vsel %vm393, %v385, %v390
    %v395 = vmul.f32 %v347, %v394
    %v396 = vmul.f32 %v362, %v395
    %v397 = vsub.f32 %v348, %v396
    %v398 = vperm.slane %v395, 0
    %v399 = vmul.f32 %v338, %v398
    %v400 = vmul.f32 %v340, %v398
    %v401 = vmul.f32 %v343, %v398
    %v402 = vmul.f32 %v345, %v398
    %v403 = vperm.slane %v397, 0
    %v404 = vadd.f32 %v399, %v403
    %v405 = vadd.f32 %v400, %v403
    %v406 = vadd.f32 %v401, %v403
    %v407 = vadd.f32 %v402, %v403
    %v408 = vmul.f32 %v404, 0.2
    %v409 = vmul.f32 %v405, 0.2
    %v410 = vmul.f32 %v406, 0.2
    %v411 = vmul.f32 %v407, 0.2
    %v412 = vmax.f32 %v404, %v408
    %v413 = vmax.f32 %v405, %v409
    %v414 = vmax.f32 %v406, %v410
    %v415 = vmax.f32 %v407, %v411
    %v416 = vpack.c.bf16 %v412, %v412
    %v417 = vpack.c.bf16 %v413, %v413
    %v418 = vpack.c.bf16 %v414, %v414
    %v419 = vpack.c.bf16 %v415, %v415
    %420 = vst.msk [vmem:[#allocation2 + $0x4] sm:$0xf] %vm77, %v416
    %421 = vst.msk [vmem:[#allocation2 + $0xc] sm:$0xf] %vm77, %v417
    %422 = vst.msk [vmem:[#allocation2 + $0x14] sm:$0xf] %vm77, %v418
    %423 = vst.msk [vmem:[#allocation2 + $0x1c] sm:$0xf] %vm77, %v419
    %v424 = vld [vmem:[#allocation2] sm:$0xff]
    %v425 = vld [vmem:[#allocation2 + $0x8] sm:$0xff]
    %v426 = vld [vmem:[#allocation2 + $0x10] sm:$0xff]
    %v427 = vld [vmem:[#allocation2 + $0x18] sm:$0xff]
    %v428 = vld [vmem:[%s5] sm:$0xf]
    %v429 = vld [vmem:[%s5 + $0x4] sm:$0xf]
    %v430 = vld [vmem:[%s5 + $0x8] sm:$0xf]
    %v431 = vld [vmem:[%s5 + $0xc] sm:$0xf]
    %v432 = vld [vmem:[%s5 + $0x10] sm:$0xf]
    %v433 = vld [vmem:[%s5 + $0x14] sm:$0xf]
    %v434 = vld [vmem:[%s5 + $0x18] sm:$0xf]
    %v435 = vld [vmem:[%s5 + $0x1c] sm:$0xf]
    %v436 = vld [vmem:[%s5 + $0x20] sm:$0xf]
    %v437 = vld [vmem:[%s5 + $0x24] sm:$0xf]
    %v438 = vld [vmem:[%s5 + $0x28] sm:$0xf]
    %v439 = vld [vmem:[%s5 + $0x2c] sm:$0xf]
    %v440 = vld [vmem:[%s5 + $0x30] sm:$0xf]
    %v441 = vld [vmem:[%s5 + $0x34] sm:$0xf]
    %v442 = vld [vmem:[%s5 + $0x38] sm:$0xf]
    %v443 = vld [vmem:[%s5 + $0x3c] sm:$0xf]
    %v444 = vld [vmem:[%s5 + $0x40] sm:$0xf]
    %v445 = vld [vmem:[%s5 + $0x44] sm:$0xf]
    %v446 = vld [vmem:[%s5 + $0x48] sm:$0xf]
    %v447 = vld [vmem:[%s5 + $0x4c] sm:$0xf]
    %v448 = vld [vmem:[%s5 + $0x50] sm:$0xf]
    %v449 = vld [vmem:[%s5 + $0x54] sm:$0xf]
    %v450 = vld [vmem:[%s5 + $0x58] sm:$0xf]
    %v451 = vld [vmem:[%s5 + $0x5c] sm:$0xf]
    %v456 = vunpack.c.l.b16 %v424
    %v457 = vunpack.c.h.b16 %v424
    %v458 = vunpack.c.l.b16 %v425
    %v459 = vunpack.c.h.b16 %v425
    %v460 = vunpack.c.l.b16 %v426
    %v461 = vunpack.c.h.b16 %v426
    %v462 = vunpack.c.l.b16 %v427
    %v463 = vunpack.c.h.b16 %v427
    %v464 = vpack.c.b16 %v458, %v456
    %v465 = vpack.c.b16 %v459, %v457
    %v466 = vpack.c.b16 %v462, %v460
    %v467 = vpack.c.b16 %v463, %v461
    %v494 = vunpack.c.l.b16 %v428
    %v495 = vunpack.c.l.b16 %v429
    %v496 = vunpack.c.l.b16 %v430
    %v497 = vunpack.c.l.b16 %v431
    %v498 = vunpack.c.l.b16 %v432
    %v499 = vunpack.c.l.b16 %v433
    %v500 = vunpack.c.l.b16 %v434
    %v501 = vunpack.c.l.b16 %v435
    %v502 = vunpack.c.l.b16 %v436
    %v503 = vunpack.c.l.b16 %v437
    %v504 = vunpack.c.l.b16 %v438
    %v505 = vunpack.c.l.b16 %v439
    %v506 = vunpack.c.l.b16 %v440
    %v507 = vunpack.c.l.b16 %v441
    %v508 = vunpack.c.l.b16 %v442
    %v509 = vunpack.c.l.b16 %v443
    %v510 = vunpack.c.l.b16 %v444
    %v511 = vunpack.c.l.b16 %v445
    %v512 = vunpack.c.l.b16 %v446
    %v513 = vunpack.c.l.b16 %v447
    %v514 = vunpack.c.l.b16 %v448
    %v515 = vunpack.c.l.b16 %v449
    %v516 = vunpack.c.l.b16 %v450
    %v517 = vunpack.c.l.b16 %v451
    %v518 = vpack.c.b16 %v495, %v494
    %v519 = vpack.c.b16 %v497, %v496
    %v520 = vpack.c.b16 %v499, %v498
    %v521 = vpack.c.b16 %v501, %v500
    %v522 = vpack.c.b16 %v503, %v502
    %v523 = vpack.c.b16 %v505, %v504
    %v524 = vpack.c.b16 %v507, %v506
    %v525 = vpack.c.b16 %v509, %v508
    %v526 = vpack.c.b16 %v511, %v510
    %v527 = vpack.c.b16 %v513, %v512
    %v528 = vpack.c.b16 %v515, %v514
    %v529 = vpack.c.b16 %v517, %v516
    %v543 = vsel %vm128, %v465, 0
    %v546 = vsel %vm128, %v467, 0
    %548 = vmatpush.bf16.msra.mxu0 %v525
    %549 = vmatpush.bf16.msra.mxu0 %v524
    %550 = vmatpush.bf16.msra.mxu0 %v523
    %551 = vmatpush.bf16.msra.mxu0 %v522
    %552 = vmatpush.bf16.msra.mxu0 %v521
    %553 = vmatpush.bf16.msra.mxu0 %v520
    %554 = vmatpush.bf16.msra.mxu0 %v519
    %555 = vmatpush.bf16.msra.mxu0 %v518
    %556 = vmatmul.bf16.gmra.mxu0 %v464
    %v557 = vpop.f32.mrf.mxu0
    %v558 = vadd.f32 0.0, %v557
    %v559 = vpop.f32.mrf.mxu0
    %v560 = vadd.f32 0.0, %v559
    %561 = vmatmul.bf16.gmra.mxu0 %v466
    %v562 = vpop.f32.mrf.mxu0
    %v563 = vadd.f32 0.0, %v562
    %v564 = vpop.f32.mrf.mxu0
    %v565 = vadd.f32 0.0, %v564
    %566 = vdwg.mxu0
    %567 = vmatpush.bf16.msra.mxu0 0
    %568 = vmatpush.bf16.msra.mxu0 0
    %569 = vmatpush.bf16.msra.mxu0 0
    %570 = vmatpush.bf16.msra.mxu0 0
    %571 = vmatpush.bf16.msra.mxu0 %v529
    %572 = vmatpush.bf16.msra.mxu0 %v528
    %573 = vmatpush.bf16.msra.mxu0 %v527
    %574 = vmatpush.bf16.msra.mxu0 %v526
    %575 = vmatmul.bf16.gmra.mxu0 %v543
    %v576 = vpop.f32.mrf.mxu0
    %v577 = vadd.f32 %v558, %v576
    %v578 = vpop.f32.mrf.mxu0
    %v579 = vadd.f32 %v560, %v578
    %580 = vmatmul.bf16.gmra.mxu0 %v546
    %v581 = vpop.f32.mrf.mxu0
    %v582 = vadd.f32 %v563, %v581
    %v583 = vpop.f32.mrf.mxu0
    %v584 = vadd.f32 %v565, %v583
    %585 = vdwg.mxu0
    %v586 = vld [vmem:[#allocation8] sm:$0x1]
    %v587 = vld [vmem:[#allocation8 + $0x1] sm:$0x1]
    %v588 = vadd.f32 %v577, %v579
    %v589 = vadd.f32 %v588, %v582
    %v590 = vadd.f32 %v589, %v584
    %v591 = vrot.slane %v590, 4
    %v592 = vadd.f32 %v590, %v591
    %v593 = vrot.slane %v592, 2
    %v594 = vadd.f32 %v592, %v593
    %v595 = vrot.slane %v594, 1
    %v596 = vadd.f32 %v594, %v595
    %v597 = vmul.f32 %v596, 0.03125
    %v598 = vmul.f32 %v577, %v577
    %v599 = vmul.f32 %v579, %v579
    %v600 = vmul.f32 %v582, %v582
    %v601 = vmul.f32 %v584, %v584
    %v602 = vadd.f32 %v598, %v599
    %v603 = vadd.f32 %v602, %v600
    %v604 = vadd.f32 %v603, %v601
    %v605 = vrot.slane %v604, 4
    %v606 = vadd.f32 %v604, %v605
    %v607 = vrot.slane %v606, 2
    %v608 = vadd.f32 %v606, %v607
    %v609 = vrot.slane %v608, 1
    %v610 = vadd.f32 %v608, %v609
    %v611 = vmul.f32 %v610, 0.03125
    %v612 = vmul.f32 %v597, %v597
    %v613 = vsub.f32 %v611, %v612
    %v614 = vmax.f32 %v613, 0.0
    %v615 = vadd.f32 %v614, 1e-05
    %v616 = vrsqrt.pop %v615
    %v617 = vmul.f32 %v616, %v615
    %v618 = vmul.f32 %v617, %v616
    %v619 = vmul.f32 0.5, %v618
    %v620 = vsub.f32 1.5, %v619
    %v621 = vmul.f32 %v616, %v620
    %vm622 = vweird.f32 %v615
    %vm623 = vweird.f32 %v616
    %vm624 = vmor %vm622, %vm623
    %v625 = vsel %vm624, %v616, %v621
    %v626 = vmul.f32 %v586, %v625
    %v627 = vmul.f32 %v597, %v626
    %v628 = vsub.f32 %v587, %v627
    %v629 = vperm.slane %v626, 0
    %v630 = vmul.f32 %v577, %v629
    %v631 = vmul.f32 %v579, %v629
    %v632 = vmul.f32 %v582, %v629
    %v633 = vmul.f32 %v584, %v629
    %v634 = vperm.slane %v628, 0
    %v635 = vadd.f32 %v630, %v634
    %v636 = vadd.f32 %v631, %v634
    %v637 = vadd.f32 %v632, %v634
    %v638 = vadd.f32 %v633, %v634
    %v639 = vmul.f32 %v635, 0.2
    %v640 = vmul.f32 %v636, 0.2
    %v641 = vmul.f32 %v637, 0.2
    %v642 = vmul.f32 %v638, 0.2
    %v643 = vmax.f32 %v635, %v639
    %v644 = vmax.f32 %v636, %v640
    %v645 = vmax.f32 %v637, %v641
    %v646 = vmax.f32 %v638, %v642
    %647 = vst [vmem:[#allocation9] sm:$0xff] %v643
    %648 = vst [vmem:[#allocation9 + $0x8] sm:$0xff] %v644
    %649 = vst [vmem:[#allocation9 + $0x10] sm:$0xff] %v645
    %650 = vst [vmem:[#allocation9 + $0x18] sm:$0xff] %v646
    // Predicated region
    $region42: #{tpu_custom_call.1} parent=1 // pred_check
      _
    $region43: #{tpu_custom_call.1} parent=1 // pred_check_branch
      %652 = sbr.rel (0) target = $region45
    $region44: #{tpu_custom_call.1} parent=1 // pred_region
      %654 = vsyncadd [#allocation5], 0
      %s655 = sshll.u32 [#allocation9], 4
      %s656 = int_to_ptr.vmem [resolvable:$true] %s655
      %s657 = sshll.u32 %s7, 4
      %s658 = int_to_ptr.hbm [resolvable:$true] %s657
      %663 = dma.vmem_to_hbm [thread:$0]  %s656, 512, %s658, [#allocation5], 128, 128, 8
    $region45: #{tpu_custom_call.1} parent=1 // pred_fallthru
      _
    // Predicated region
    $region46: #{tpu_custom_call.1} parent=1 // pred_check
      _
    $region47: #{tpu_custom_call.1} parent=1 // pred_check_branch
      %665 = sbr.rel (0) target = $region49
    $region48: #{tpu_custom_call.1} parent=1 // pred_region
      %667 = dma.done [#allocation5], 512
    $region49: #{tpu_custom_call.1} parent=1 // pred_fallthru
      _
    %668 = vsyncpa [#allocation4], 1
    %669 = vsyncpa [#allocation7], 1
    %670 = vsyncpa [#allocation5], 1

</llo_original>
